<compile_context>
chip_gen: v7x
topology: tpu7x:2x2x1
jax: 0.10.0
libtpu: 0.0.40
codegen_flags: <defaults>
</compile_context>

<pallas_src>
import jax
import jax.numpy as jnp
from jax.experimental import pallas as pl
from jax.experimental.pallas import tpu as pltpu

_VMEM_LIMIT = 32 * 1024 * 1024   # explicit scoped-VMEM budget (safe on v5e/v6e/v7x)


def _round_up(x, m):
    return (x + m - 1) // m * m


# ----------------------------------------------------------------------------
# Pallas kernels
# ----------------------------------------------------------------------------
def _stem_matmul_kernel(a_ref, w_ref, o_ref):
    # out = A @ W  (bf16 x bf16 -> f32 MXU accumulate -> bf16 store), no bias/relu
    acc = jnp.dot(a_ref[...], w_ref[...], preferred_element_type=jnp.float32)
    o_ref[...] = acc.astype(o_ref.dtype)


def _fused_decoder_kernel(f_ref, w3_ref, w1_ref, b_ref, o_ref):
    # f_ref : (th+2, wo+2, C) bf16  zero-halo'd feature row band (halo == conv pad 1)
    # w3_ref: (9*C, 512)      bf16  both heads' 3x3 conv weights, tap-major rows
    # w1_ref: (512, No)       bf16  [W1_cl ; W1_dist] row-stacked, column-packed
    # b_ref : (1, No)         f32   packed biases
    # o_ref : (th*wo, No)     f32
    thp, wop, c = f_ref.shape
    th, wo = thp - 2, wop - 2
    f = f_ref[...]
    # in-VMEM im2col: 9 shifted (th, wo, C) views -> (th*wo, 9*C); never touches HBM
    taps = [f[di:di + th, dj:dj + wo, :] for di in range(3) for dj in range(3)]
    a = jnp.concatenate(taps, axis=-1).reshape(th * wo, 9 * c)
    # both heads' 3x3 conv (N = 512) -> ReLU, all resident in VMEM
    h = jnp.dot(a, w3_ref[...], preferred_element_type=jnp.float32)
    h = jnp.maximum(h, 0.0).astype(jnp.bfloat16)
    # packed 1x1 classifiers: single dense (512, No) matmul (no zero half)
    out = jnp.dot(h, w1_ref[...], preferred_element_type=jnp.float32)
    o_ref[...] = out + b_ref[...]          # (1, No) f32 bias broadcasts over rows


# ----------------------------------------------------------------------------
# Helpers
# ----------------------------------------------------------------------------
def _im2col_nhwc(x, kh, kw, stride, pad):
    n, h, w, c = x.shape
    xp = jnp.pad(x, ((0, 0), (pad, pad), (pad, pad), (0, 0)))
    ho = (h + 2 * pad - kh) // stride + 1
    wo = (w + 2 * pad - kw) // stride + 1
    cols = []
    for i in range(kh):
        for j in range(kw):
            cols.append(xp[:, i:i + ho * stride:stride, j:j + wo * stride:stride, :])
    patches = jnp.concatenate(cols, axis=-1)           # (n, ho, wo, kh*kw*c)
    return patches.reshape(n * ho * wo, kh * kw * c), (n, ho, wo)


def _m_tiling(M, cap=1024):
    """M tile: multiple of 8, <= cap, and (when possible) >= 2 grid steps (v7x: 2 TCs)."""
    tm = min(cap, _round_up(M, 8))
    while tm > 8 and _round_up(M, tm) // tm < 2:
        tm = _round_up(tm // 2, 8)
    return tm, _round_up(M, tm)


# ----------------------------------------------------------------------------
# Stem: Conv2d(channels, 64, 7x7, s2, p3, bias=False) as one Pallas matmul
# ----------------------------------------------------------------------------
def stem_conv(x_nhwc, w_hwio):
    kh, kw, cin, cout = w_hwio.shape
    a, (n, ho, wo) = _im2col_nhwc(x_nhwc, kh, kw, stride=2, pad=3)   # (M, 49*cin)
    M, K = a.shape
    Kp = _round_up(K, 128)               # 196 -> 256
    Np = _round_up(cout, 128)            # 64  -> 128: lane-dense, unmasked stores

    tm, Mp = _m_tiling(M, cap=1024)
    a = jnp.pad(a.astype(jnp.bfloat16), ((0, Mp - M), (0, Kp - K)))
    w2d = jnp.pad(w_hwio.reshape(K, cout),
                  ((0, Kp - K), (0, Np - cout))).astype(jnp.bfloat16)

    out = pl.pallas_call(
        _stem_matmul_kernel,
        out_shape=jax.ShapeDtypeStruct((Mp, Np), jnp.bfloat16),
        grid_spec=pltpu.PrefetchScalarGridSpec(
            num_scalar_prefetch=0,
            grid=(Mp // tm,),
            in_specs=[pl.BlockSpec((tm, Kp), lambda i: (i, 0)),
                      pl.BlockSpec((Kp, Np), lambda i: (0, 0))],
            out_specs=pl.BlockSpec((tm, Np), lambda i: (i, 0)),
        ),
        compiler_params=pltpu.CompilerParams(
            dimension_semantics=("parallel",),
            vmem_limit_bytes=_VMEM_LIMIT),
    )(a, w2d)

    # bf16 feature map halves downstream HBM reads
    return out[:M, :cout].reshape(n, ho, wo, cout)


# ----------------------------------------------------------------------------
# Fused decoders: both heads' (3x3 conv + ReLU + 1x1 classifier) in one kernel,
# with the 3x3 window expansion done *inside* the kernel (no HBM im2col).
# ----------------------------------------------------------------------------
def fused_decoders(feat_nhwc, p_cl, p_dist, nb_classes):
    n, ho, wo, c = feat_nhwc.shape                     # c == 64
    c_mid = p_cl["w3"].shape[-1]                       # 256
    K = 9 * c                                          # 576
    nb = nb_classes
    No = _round_up(2 * nb, 128)                        # both heads packed, lane-dense

    # ---- spatial row-band tiling (halo = 1 pixel == conv padding, baked in as zeros)
    target_rows = 1024                                 # ~1k output pixels per grid step
    th = max(1, min(ho, target_rows // max(wo, 1)))
    nrt = pl.cdiv(ho, th)
    if n * nrt < 2 and th > 1:                         # >=2 grid steps for v7x's 2 TCs
        th = pl.cdiv(th, 2)
        nrt = pl.cdiv(ho, th)
    hp = nrt * th
    fp = jnp.pad(feat_nhwc, ((0, 0), (1, 1 + hp - ho), (1, 1), (0, 0)))
    # overlapping row bands: only (th+2)/th HBM duplication instead of the old 9x im2col
    ft = jnp.stack([fp[:, r * th: r * th + th + 2] for r in range(nrt)], axis=1)
    # ft: (n, nrt, th+2, wo+2, c)

    # ---- weights ----
    # W3 fused along Cout for both heads: (576, 512)
    w3 = jnp.concatenate([p_cl["w3"].reshape(K, c_mid),
                          p_dist["w3"].reshape(K, c_mid)], axis=1).astype(jnp.bfloat16)

    # W1 row-stacked and column-packed: cl -> cols [0, nb), dist -> cols [nb, 2nb)
    def _packed_w1(w1, off):
        w = jnp.zeros((c_mid, No), jnp.float32)
        return w.at[:, off:off + nb].set(w1.reshape(c_mid, nb))
    w1 = jnp.concatenate([_packed_w1(p_cl["w1"], 0),
                          _packed_w1(p_dist["w1"], nb)], axis=0).astype(jnp.bfloat16)

    bias = jnp.zeros((1, No), jnp.float32)
    bias = bias.at[0, :nb].set(p_cl["b1"]).at[0, nb:2 * nb].set(p_dist["b1"])

    Mt = th * wo
    out = pl.pallas_call(
        _fused_decoder_kernel,
        out_shape=jax.ShapeDtypeStruct((n, nrt, Mt, No), jnp.float32),
        grid_spec=pltpu.PrefetchScalarGridSpec(
            num_scalar_prefetch=0,
            grid=(n, nrt),
            in_specs=[
                pl.BlockSpec((None, None, th + 2, wo + 2, c),
                             lambda b, r: (b, r, 0, 0, 0)),
                pl.BlockSpec((K, 2 * c_mid), lambda b, r: (0, 0)),
                pl.BlockSpec((2 * c_mid, No), lambda b, r: (0, 0)),
                pl.BlockSpec((1, No), lambda b, r: (0, 0)),
            ],
            out_specs=pl.BlockSpec((None, None, Mt, No), lambda b, r: (b, r, 0, 0)),
        ),
        compiler_params=pltpu.CompilerParams(
            dimension_semantics=("parallel", "parallel"),
            vmem_limit_bytes=_VMEM_LIMIT),
    )(ft, w3, w1, bias)

    out = out.reshape(n, hp, wo, No)[:, :ho]           # drop bottom-band padding rows
    return out[..., :nb], out[..., nb:2 * nb]


# ----------------------------------------------------------------------------
# new_model forward
# ----------------------------------------------------------------------------
def init_params(key, channels, nb_classes):
    ks = jax.random.split(key, 7)
    s = 0.05
    p = {
        # encoder.backbone.conv1 : Conv2d(channels, 64, 7x7, s2, p3, bias=False)
        "conv1_w": jax.random.normal(ks[0], (7, 7, channels, 64), jnp.float32) * s,
    }
    for name, k3, k1, kb in (("cl", ks[1], ks[2], ks[3]),
                             ("dist", ks[4], ks[5], ks[6])):
        p[name] = {
            # decoder classifier body: Conv2d(64, 256, 3x3, p1, bias=False) + ReLU
            "w3": jax.random.normal(k3, (3, 3, 64, 256), jnp.float32) * s,
            # decoder classifier[4]: Conv2d(256, nb_classes, 1x1)
            "w1": jax.random.normal(k1, (1, 1, 256, nb_classes), jnp.float32) * s,
            "b1": jax.random.normal(kb, (nb_classes,), jnp.float32) * s,
        }
    return p


def new_model_forward(x_nchw, params):
    nb_classes = params["cl"]["b1"].shape[0]
    x = jnp.transpose(x_nchw, (0, 2, 3, 1))                    # NCHW -> NHWC
    feat = stem_conv(x, params["conv1_w"])
    out_cl, out_di = fused_decoders(feat, params["cl"], params["dist"], nb_classes)
    return (jnp.transpose(out_cl, (0, 3, 1, 2)),               # NHWC -> NCHW
            jnp.transpose(out_di, (0, 3, 1, 2)))


# ----------------------------------------------------------------------------
# Pure-JAX f32 reference (lax.conv) for correctness check
# ----------------------------------------------------------------------------
def _ref_conv(x, w, b, stride, pad, relu):
    out = jax.lax.conv_general_dilated(
        x, w, window_strides=(stride, stride), padding=[(pad, pad), (pad, pad)],
        dimension_numbers=("NHWC", "HWIO", "NHWC"))
    if b is not None:
        out = out + b
    return jnp.maximum(out, 0.0) if relu else out


def reference_forward(x_nchw, params):
    x = jnp.transpose(x_nchw, (0, 2, 3, 1))
    feat = _ref_conv(x, params["conv1_w"], None, 2, 3, False)

    def decoder(hp):
        h = _ref_conv(feat, hp["w3"], None, 1, 1, True)
        o = _ref_conv(h, hp["w1"], hp["b1"], 1, 0, False)
        return jnp.transpose(o, (0, 3, 1, 2))

    return decoder(params["cl"]), decoder(params["dist"])


if __name__ == "__main__":
    key = jax.random.PRNGKey(0)
    k_x, k_p = jax.random.split(key)

    batch, channels, spatial, nb_classes = 2, 4, 16, 3
    x = jax.random.normal(k_x, (batch, channels, spatial, spatial), jnp.float32)
    params = init_params(k_p, channels, nb_classes)

    out1, out2 = jax.jit(new_model_forward)(x, params)
    jax.block_until_ready((out1, out2))

    ref1, ref2 = reference_forward(x, params)
    assert out1.shape == (batch, nb_classes, spatial // 2, spatial // 2)
    assert out2.shape == (batch, nb_classes, spatial // 2, spatial // 2)
    # bf16 matmul inputs / bf16 feature map -> slightly looser tolerance than pure f32
    assert jnp.allclose(out1, ref1, atol=3e-2, rtol=3e-2), \
        float(jnp.max(jnp.abs(out1 - ref1)))
    assert jnp.allclose(out2, ref2, atol=3e-2, rtol=3e-2), \
        float(jnp.max(jnp.abs(out2 - ref2)))

    print("KERNEL_OK")
</pallas_src>

<mosaic_0001>
module attributes {stable_mosaic.version = 11 : i64} {
  func.func @_stem_matmul_kernel(%arg0: i32, %arg1: memref<64x256xbf16, #tpu.memory_space<vmem>>, %arg2: memref<256x128xbf16, #tpu.memory_space<vmem>>, %arg3: memref<64x128xbf16, #tpu.memory_space<vmem>>) attributes {dimension_semantics = [#tpu.dimension_semantics<parallel>], iteration_bounds = array<i64: 2>, scalar_prefetch = 0 : i64, scratch_operands = 0 : i64, tpu.core_type = #tpu.core_type<tc>, window_params = [{transform_indices = @transform_0, window_bounds = array<i64: 64, 256>}, {pipeline_mode = #tpu.pipeline_mode<synchronous>, transform_indices = @transform_1, window_bounds = array<i64: 256, 128>}, {transform_indices = @transform_2, window_bounds = array<i64: 64, 128>}]} {
    %c0 = arith.constant 0 : index
    %c0_0 = arith.constant 0 : index
    %0 = vector.load %arg1[%c0, %c0_0] : memref<64x256xbf16, #tpu.memory_space<vmem>>, vector<64x256xbf16>
    %c0_1 = arith.constant 0 : index
    %c0_2 = arith.constant 0 : index
    %1 = vector.load %arg2[%c0_1, %c0_2] : memref<256x128xbf16, #tpu.memory_space<vmem>>, vector<256x128xbf16>
    %cst = arith.constant dense<0.000000e+00> : vector<64x128xf32>
    %2 = tpu.matmul %0, %1, %cst {dimension_numbers = #tpu.dot_dimension_numbers<[1], [0], [0], [1], [0, 0, 1, 1], [], []>} : vector<64x256xbf16>, vector<256x128xbf16>, vector<64x128xf32> -> vector<64x128xf32>
    %3 = arith.truncf %2 : vector<64x128xf32> to vector<64x128xbf16>
    %c0_3 = arith.constant 0 : index
    %c0_4 = arith.constant 0 : index
    %4 = vector.load %arg3[%c0_3, %c0_4] : memref<64x128xbf16, #tpu.memory_space<vmem>>, vector<64x128xbf16>
    tpu.vector_store %arg3[%c0_3, %c0_4], %3 {strides = array<i32>} : memref<64x128xbf16, #tpu.memory_space<vmem>>, vector<64x128xbf16>,
    return
  }
  func.func @transform_0(%arg0: i32) -> (i32, i32) {
    %c0_i32 = arith.constant 0 : i32
    %c0_i32_0 = arith.constant 0 : i32
    return %arg0, %c0_i32 : i32, i32
  }
  func.func @transform_1(%arg0: i32) -> (i32, i32) {
    %c0_i32 = arith.constant 0 : i32
    %c0_i32_0 = arith.constant 0 : i32
    %c0_i32_1 = arith.constant 0 : i32
    return %c0_i32, %c0_i32_0 : i32, i32
  }
  func.func @transform_2(%arg0: i32) -> (i32, i32) {
    %c0_i32 = arith.constant 0 : i32
    %c0_i32_0 = arith.constant 0 : i32
    return %arg0, %c0_i32 : i32, i32
  }
}

module attributes {stable_mosaic.version = 11 : i64} {
  func.func @_fused_decoder_kernel(%arg0: i32, %arg1: i32, %arg2: memref<1x1x10x10x64xbf16, #tpu.memory_space<vmem>>, %arg3: memref<576x512xbf16, #tpu.memory_space<vmem>>, %arg4: memref<512x128xbf16, #tpu.memory_space<vmem>>, %arg5: memref<1x128xf32, #tpu.memory_space<vmem>>, %arg6: memref<1x1x64x128xf32, #tpu.memory_space<vmem>>) attributes {dimension_semantics = [#tpu.dimension_semantics<parallel>, #tpu.dimension_semantics<parallel>], iteration_bounds = array<i64: 2, 1>, scalar_prefetch = 0 : i64, scratch_operands = 0 : i64, tpu.core_type = #tpu.core_type<tc>, window_params = [{transform_indices = @transform_0, window_bounds = array<i64: 1, 1, 10, 10, 64>}, {pipeline_mode = #tpu.pipeline_mode<synchronous>, transform_indices = @transform_1, window_bounds = array<i64: 576, 512>}, {pipeline_mode = #tpu.pipeline_mode<synchronous>, transform_indices = @transform_2, window_bounds = array<i64: 512, 128>}, {pipeline_mode = #tpu.pipeline_mode<synchronous>, transform_indices = @transform_3, window_bounds = array<i64: 1, 128>}, {transform_indices = @transform_4, window_bounds = array<i64: 1, 1, 64, 128>}]} {
    %c0 = arith.constant 0 : index
    %c0_0 = arith.constant 0 : index
    %c0_1 = arith.constant 0 : index
    %c0_2 = arith.constant 0 : index
    %c0_3 = arith.constant 0 : index
    %0 = vector.load %arg2[%c0, %c0_0, %c0_1, %c0_2, %c0_3] : memref<1x1x10x10x64xbf16, #tpu.memory_space<vmem>>, vector<1x1x10x10x64xbf16>
    %1 = vector.shape_cast %0 : vector<1x1x10x10x64xbf16> to vector<10x10x64xbf16>
    %2 = vector.extract_strided_slice %1 {offsets = [0, 0, 0], sizes = [8, 8, 64], strides = [1, 1, 1]} : vector<10x10x64xbf16> to vector<8x8x64xbf16>
    %3 = vector.extract_strided_slice %1 {offsets = [0, 1, 0], sizes = [8, 8, 64], strides = [1, 1, 1]} : vector<10x10x64xbf16> to vector<8x8x64xbf16>
    %4 = vector.extract_strided_slice %1 {offsets = [0, 2, 0], sizes = [8, 8, 64], strides = [1, 1, 1]} : vector<10x10x64xbf16> to vector<8x8x64xbf16>
    %5 = vector.extract_strided_slice %1 {offsets = [1, 0, 0], sizes = [8, 8, 64], strides = [1, 1, 1]} : vector<10x10x64xbf16> to vector<8x8x64xbf16>
    %6 = vector.extract_strided_slice %1 {offsets = [1, 1, 0], sizes = [8, 8, 64], strides = [1, 1, 1]} : vector<10x10x64xbf16> to vector<8x8x64xbf16>
    %7 = vector.extract_strided_slice %1 {offsets = [1, 2, 0], sizes = [8, 8, 64], strides = [1, 1, 1]} : vector<10x10x64xbf16> to vector<8x8x64xbf16>
    %8 = vector.extract_strided_slice %1 {offsets = [2, 0, 0], sizes = [8, 8, 64], strides = [1, 1, 1]} : vector<10x10x64xbf16> to vector<8x8x64xbf16>
    %9 = vector.extract_strided_slice %1 {offsets = [2, 1, 0], sizes = [8, 8, 64], strides = [1, 1, 1]} : vector<10x10x64xbf16> to vector<8x8x64xbf16>
    %10 = vector.extract_strided_slice %1 {offsets = [2, 2, 0], sizes = [8, 8, 64], strides = [1, 1, 1]} : vector<10x10x64xbf16> to vector<8x8x64xbf16>
    %11 = tpu.concatenate %2, %3, %4, %5, %6, %7, %8, %9, %10 in 2 : vector<8x8x64xbf16>, vector<8x8x64xbf16>, vector<8x8x64xbf16>, vector<8x8x64xbf16>, vector<8x8x64xbf16>, vector<8x8x64xbf16>, vector<8x8x64xbf16>, vector<8x8x64xbf16>, vector<8x8x64xbf16> -> vector<8x8x576xbf16>
    %12 = vector.shape_cast %11 : vector<8x8x576xbf16> to vector<64x576xbf16>
    %c0_4 = arith.constant 0 : index
    %c0_5 = arith.constant 0 : index
    %13 = vector.load %arg3[%c0_4, %c0_5] : memref<576x512xbf16, #tpu.memory_space<vmem>>, vector<576x512xbf16>
    %cst = arith.constant dense<0.000000e+00> : vector<64x512xf32>
    %14 = tpu.matmul %12, %13, %cst {dimension_numbers = #tpu.dot_dimension_numbers<[1], [0], [0], [1], [0, 0, 1, 1], [], []>} : vector<64x576xbf16>, vector<576x512xbf16>, vector<64x512xf32> -> vector<64x512xf32>
    %cst_6 = arith.constant 0.000000e+00 : f32
    %15 = vector.broadcast %cst_6 : f32 to vector<64x512xf32>
    %16 = arith.maximumf %14, %15 : vector<64x512xf32>
    %17 = arith.truncf %16 : vector<64x512xf32> to vector<64x512xbf16>
    %c0_7 = arith.constant 0 : index
    %c0_8 = arith.constant 0 : index
    %18 = vector.load %arg4[%c0_7, %c0_8] : memref<512x128xbf16, #tpu.memory_space<vmem>>, vector<512x128xbf16>
    %cst_9 = arith.constant dense<0.000000e+00> : vector<64x128xf32>
    %19 = tpu.matmul %17, %18, %cst_9 {dimension_numbers = #tpu.dot_dimension_numbers<[1], [0], [0], [1], [0, 0, 1, 1], [], []>} : vector<64x512xbf16>, vector<512x128xbf16>, vector<64x128xf32> -> vector<64x128xf32>
    %c0_10 = arith.constant 0 : index
    %c0_11 = arith.constant 0 : index
    %20 = vector.load %arg5[%c0_10, %c0_11] : memref<1x128xf32, #tpu.memory_space<vmem>>, vector<1x128xf32>
    %21 = vector.broadcast %20 : vector<1x128xf32> to vector<64x128xf32>
    %22 = arith.addf %19, %21 : vector<64x128xf32>
    %c0_12 = arith.constant 0 : index
    %c0_13 = arith.constant 0 : index
    %c0_14 = arith.constant 0 : index
    %c0_15 = arith.constant 0 : index
    %23 = vector.load %arg6[%c0_12, %c0_13, %c0_14, %c0_15] : memref<1x1x64x128xf32, #tpu.memory_space<vmem>>, vector<1x1x64x128xf32>
    %24 = vector.shape_cast %23 : vector<1x1x64x128xf32> to vector<64x128xf32>
    %25 = vector.shape_cast %22 : vector<64x128xf32> to vector<1x1x64x128xf32>
    tpu.vector_store %arg6[%c0_12, %c0_13, %c0_14, %c0_15], %25 {strides = array<i32>} : memref<1x1x64x128xf32, #tpu.memory_space<vmem>>, vector<1x1x64x128xf32>,
    return
  }
  func.func @transform_0(%arg0: i32, %arg1: i32) -> (i32, i32, i32, i32, i32) {
    %c0_i32 = arith.constant 0 : i32
    %c0_i32_0 = arith.constant 0 : i32
    %c0_i32_1 = arith.constant 0 : i32
    %c0_i32_2 = arith.constant 0 : i32
    return %arg0, %arg1, %c0_i32, %c0_i32_0, %c0_i32_1 : i32, i32, i32, i32, i32
  }
  func.func @transform_1(%arg0: i32, %arg1: i32) -> (i32, i32) {
    %c0_i32 = arith.constant 0 : i32
    %c0_i32_0 = arith.constant 0 : i32
    %c0_i32_1 = arith.constant 0 : i32
    return %c0_i32, %c0_i32_0 : i32, i32
  }
  func.func @transform_2(%arg0: i32, %arg1: i32) -> (i32, i32) {
    %c0_i32 = arith.constant 0 : i32
    %c0_i32_0 = arith.constant 0 : i32
    %c0_i32_1 = arith.constant 0 : i32
    return %c0_i32, %c0_i32_0 : i32, i32
  }
  func.func @transform_3(%arg0: i32, %arg1: i32) -> (i32, i32) {
    %c0_i32 = arith.constant 0 : i32
    %c0_i32_0 = arith.constant 0 : i32
    %c0_i32_1 = arith.constant 0 : i32
    return %c0_i32, %c0_i32_0 : i32, i32
  }
  func.func @transform_4(%arg0: i32, %arg1: i32) -> (i32, i32, i32, i32) {
    %c0_i32 = arith.constant 0 : i32
    %c0_i32_0 = arith.constant 0 : i32
    %c0_i32_1 = arith.constant 0 : i32
    return %arg0, %arg1, %c0_i32, %c0_i32_0 : i32, i32, i32, i32
  }
}

</mosaic_0001>

<llo_original>
// kernel: new_model_forward.2
$region0: #{new_model_forward.2}
  #allocation0 [shape = 'u32[]', space=smem, size = 0x4, offset = 0x4, fixed_abs, tag = 'smem constant byte address 0x4 - core index']
  #allocation1 [shape = 'u32[144,128]{1,0:T(1,128)}', space=vmem, size = 0x12000, scoped, tag = 'internal scratch']
  %s0 = inlined_call_operand.vmem [shape: bf16[128,256], index: 0, kind: input, shape index: {}]
  %s1 = inlined_call_operand.vmem [shape: bf16[256,128], index: 1, kind: input, shape index: {}]
  %s2 = inlined_call_operand.vmem [shape: bf16[128,128], index: 2, kind: output, shape index: {}]
  %s3 = sld [smem:[#allocation0]]
  $region41: #{new_model_forward.2} parent=0
    _
  %s5 = ssub.s32 1, %s3
  %s6 = scalar_select 0, %s5, %s3
  loop: start=0, step=1, limit=4
  $region2: #{new_model_forward.2} parent=0 // loop_pre_header
    _
  $region3: #{new_model_forward.2} parent=0 // loop_header
    %s8 = sphi 0, %s12
    %p9 = scmp.ge.s32.totalorder %s8, 4
    %s18 = sphi 0, %s20
    %s21 = sphi 0, %s18
    %s22 = sphi 0, %s21
    %s38 = sphi 0, %s22
    %s42 = sphi 0, %s42
    %s44 = sphi 0, %s42
    %s45 = sphi 0, %s44
    %s59 = sphi 0, %s45
    %s65 = sphi 0, %s67
    %s68 = sphi 0, %s65
    %s69 = sphi 0, %s68
    %s85 = sphi 0, %s69
  $region4: #{new_model_forward.2} parent=0 // loop_header_branch
    %11 = sbr.rel (%p9) target = $region8
  $region5: #{new_model_forward.2} parent=0 // loop_body
    %s13 = ssub.s32 %s8, 1
    %s14 = ssub.s32 %s8, 2
    %s15 = sadd.s32 %s8, 1
    %s16 = ssub.s32 %s8, %s15
    %p17 = scmp.eq.s32.totalorder %s16, 0
    %s19 = sadd.s32 %s18, 1
    %s20 = scalar_select %p17, %s18, %s19
    %p23 = pneg %p17
    %p24 = scmp.eq.s32.totalorder %s8, 1
    %p25 = por %p23, %p24
    %p26 = scmp.ne.s32.totalorder %s18, %s21
    %p27 = scmp.eq.s32.totalorder %s8, 0
    %p28 = por %p26, %p27
    %p29 = scmp.ne.s32.totalorder %s18, %s21
    %p30 = scmp.eq.s32.totalorder %s13, 1
    %p31 = por %p29, %p30
    %p32 = scmp.ne.s32.totalorder %s21, %s22
    %p33 = scmp.eq.s32.totalorder %s13, 0
    %p34 = por %p32, %p33
    %p35 = scmp.ne.s32.totalorder %s21, %s22
    %p36 = scmp.eq.s32.totalorder %s14, 1
    %p37 = por %p35, %p36
    %p39 = scmp.ne.s32.totalorder %s22, %s38
    %p40 = scmp.eq.s32.totalorder %s14, 0
    %p41 = por %p39, %p40
    %s43 = sadd.s32 %s42, 1
    %p46 = scmp.eq.s32.totalorder %s8, 1
    %p47 = scmp.ne.s32.totalorder %s42, %s44
    %p48 = scmp.eq.s32.totalorder %s8, 0
    %p49 = por %p47, %p48
    %p50 = scmp.ne.s32.totalorder %s42, %s44
    %p51 = scmp.eq.s32.totalorder %s13, 1
    %p52 = por %p50, %p51
    %p53 = scmp.ne.s32.totalorder %s44, %s45
    %p54 = scmp.eq.s32.totalorder %s13, 0
    %p55 = por %p53, %p54
    %p56 = scmp.ne.s32.totalorder %s44, %s45
    %p57 = scmp.eq.s32.totalorder %s14, 1
    %p58 = por %p56, %p57
    %p60 = scmp.ne.s32.totalorder %s45, %s59
    %p61 = scmp.eq.s32.totalorder %s14, 0
    %p62 = por %p60, %p61
    %s63 = ssub.s32 %s8, %s15
    %p64 = scmp.eq.s32.totalorder %s63, 0
    %s66 = sadd.s32 %s65, 1
    %s67 = scalar_select %p64, %s65, %s66
    %p70 = pneg %p64
    %p71 = scmp.eq.s32.totalorder %s8, 1
    %p72 = por %p70, %p71
    %p73 = scmp.ne.s32.totalorder %s65, %s68
    %p74 = scmp.eq.s32.totalorder %s8, 0
    %p75 = por %p73, %p74
    %p76 = scmp.ne.s32.totalorder %s65, %s68
    %p77 = scmp.eq.s32.totalorder %s13, 1
    %p78 = por %p76, %p77
    %p79 = scmp.ne.s32.totalorder %s68, %s69
    %p80 = scmp.eq.s32.totalorder %s13, 0
    %p81 = por %p79, %p80
    %p82 = scmp.ne.s32.totalorder %s68, %s69
    %p83 = scmp.eq.s32.totalorder %s14, 1
    %p84 = por %p82, %p83
    %p86 = scmp.ne.s32.totalorder %s69, %s85
    %p87 = scmp.eq.s32.totalorder %s14, 0
    %p88 = por %p86, %p87
    %p89 = scmp.le.s32.totalorder 1, %s8
    %p90 = scmp.lt.s32.totalorder %s8, 3
    %p91 = pnand %p89, %p90
    %p92 = pneg %p91
    // Predicated region
    $region9: #{new_model_forward.2} parent=5 // pred_check
      _
    $region10: #{new_model_forward.2} parent=5 // pred_check_branch
      %94 = sbr.rel (%p91) target = $region12
    $region11: #{new_model_forward.2} parent=5 // pred_region
      %s95 = ssub.s32 %s8, 1
      // Predicated region
      $region13: #{new_model_forward.2} parent=11 // pred_check
        %p96 = pneg %p55
      $region14: #{new_model_forward.2} parent=11 // pred_check_branch
        %98 = sbr.rel (%p96) target = $region16
      $region15: #{new_model_forward.2} parent=11 // pred_region
        _
      $region16: #{new_model_forward.2} parent=11 // pred_fallthru
        _
    $region12: #{new_model_forward.2} parent=5 // pred_fallthru
      _
    %p99 = scmp.lt.s32.totalorder %s8, 2
    // Predicated region
    $region17: #{new_model_forward.2} parent=5 // pred_check
      %p100 = pneg %p99
    $region18: #{new_model_forward.2} parent=5 // pred_check_branch
      %102 = sbr.rel (%p100) target = $region20
    $region19: #{new_model_forward.2} parent=5 // pred_region
      // Predicated region
      $region21: #{new_model_forward.2} parent=19 // pred_check
        %p103 = pneg %p28
      $region22: #{new_model_forward.2} parent=19 // pred_check_branch
        %105 = sbr.rel (%p103) target = $region24
      $region23: #{new_model_forward.2} parent=19 // pred_region
        %s106 = smul.u32 8, %s8
        %p107 = scmp.lt.s32.totalorder %s106, 15
        %s108 = scalar_select %p107, %s106, 15
        %s109 = smul.addr %s108, 2
        %s110 = smul.addr %s109, 4
        %s111 = scalar_lea.vmem %s0, %s110
        %s112 = smul.u32 8, %s8
      $region24: #{new_model_forward.2} parent=19 // pred_fallthru
        _
    $region20: #{new_model_forward.2} parent=5 // pred_fallthru
      _
    %p113 = scmp.le.s32.totalorder 1, %s8
    %p114 = scmp.lt.s32.totalorder %s8, 3
    %p115 = pnand %p113, %p114
    %p116 = pneg %p115
    // Predicated region
    $region25: #{new_model_forward.2} parent=5 // pred_check
      _
    $region26: #{new_model_forward.2} parent=5 // pred_check_branch
      %118 = sbr.rel (%p115) target = $region28
    $region27: #{new_model_forward.2} parent=5 // pred_region
      %s119 = ssub.s32 %s8, 1
      %s120 = smul.u32 8, %s13
      %p121 = scmp.lt.s32.totalorder %s120, 15
      %s122 = scalar_select %p121, %s120, 15
      %s123 = smul.addr %s122, 2
      %s124 = smul.addr %s123, 4
      %s125 = scalar_lea.vmem %s0, %s124
      %p126 = pneg %p34
      %p127 = pneg %p31
      %p128 = pneg %p55
      %p129 = pneg %p52
      %p130 = pneg %p81
      %p131 = pneg %p78
      %s132 = smul.u32 8, %s13
      %p133 = scmp.lt.s32.totalorder %s132, 15
      %s134 = scalar_select %p133, %s132, 15
      %s135 = smul.addr %s134, 4
      %s136 = scalar_lea.vmem %s2, %s135
      %s137 = smul.u32 8, %s13
      %p138 = scmp.lt.s32.totalorder %s137, 15
      %s139 = scalar_select %p138, %s137, 15
      %s140 = smul.addr %s139, 2
      %s141 = smul.addr %s140, 4
      %s142 = scalar_lea.vmem %s0, %s141
      %s143 = smul.u32 8, %s13
      %s144 = smul.u32 8, %s13
      %p145 = scmp.lt.s32.totalorder %s144, 15
      %s146 = scalar_select %p145, %s144, 15
      %s147 = smul.addr %s146, 4
      %s148 = scalar_lea.vmem %s2, %s147
      %s149 = smul.u32 8, %s13
      %v151 = vld [vmem:[%s142] sm:$0xff]
      %v152 = vld [vmem:[%s142 + $0x8] sm:$0xff]
      %v153 = vld [vmem:[%s142 + $0x10] sm:$0xff]
      %v154 = vld [vmem:[%s142 + $0x18] sm:$0xff]
      %v155 = vld [vmem:[%s142 + $0x20] sm:$0xff]
      %v156 = vld [vmem:[%s142 + $0x28] sm:$0xff]
      %v157 = vld [vmem:[%s142 + $0x30] sm:$0xff]
      %v158 = vld [vmem:[%s142 + $0x38] sm:$0xff]
      %v159 = vld [vmem:[%s1] sm:$0xf]
      %v160 = vld [vmem:[%s1 + $0x4] sm:$0xf]
      %v161 = vld [vmem:[%s1 + $0x8] sm:$0xf]
      %v162 = vld [vmem:[%s1 + $0xc] sm:$0xf]
      %v163 = vld [vmem:[%s1 + $0x10] sm:$0xf]
      %v164 = vld [vmem:[%s1 + $0x14] sm:$0xf]
      %v165 = vld [vmem:[%s1 + $0x18] sm:$0xf]
      %v166 = vld [vmem:[%s1 + $0x1c] sm:$0xf]
      %v167 = vld [vmem:[%s1 + $0x20] sm:$0xf]
      %v168 = vld [vmem:[%s1 + $0x24] sm:$0xf]
      %v169 = vld [vmem:[%s1 + $0x28] sm:$0xf]
      %v170 = vld [vmem:[%s1 + $0x2c] sm:$0xf]
      %v171 = vld [vmem:[%s1 + $0x30] sm:$0xf]
      %v172 = vld [vmem:[%s1 + $0x34] sm:$0xf]
      %v173 = vld [vmem:[%s1 + $0x38] sm:$0xf]
      %v174 = vld [vmem:[%s1 + $0x3c] sm:$0xf]
      %v175 = vld [vmem:[%s1 + $0x40] sm:$0xf]
      %v176 = vld [vmem:[%s1 + $0x44] sm:$0xf]
      %v177 = vld [vmem:[%s1 + $0x48] sm:$0xf]
      %v178 = vld [vmem:[%s1 + $0x4c] sm:$0xf]
      %v179 = vld [vmem:[%s1 + $0x50] sm:$0xf]
      %v180 = vld [vmem:[%s1 + $0x54] sm:$0xf]
      %v181 = vld [vmem:[%s1 + $0x58] sm:$0xf]
      %v182 = vld [vmem:[%s1 + $0x5c] sm:$0xf]
      %v183 = vld [vmem:[%s1 + $0x60] sm:$0xf]
      %v184 = vld [vmem:[%s1 + $0x64] sm:$0xf]
      %v185 = vld [vmem:[%s1 + $0x68] sm:$0xf]
      %v186 = vld [vmem:[%s1 + $0x6c] sm:$0xf]
      %v187 = vld [vmem:[%s1 + $0x70] sm:$0xf]
      %v188 = vld [vmem:[%s1 + $0x74] sm:$0xf]
      %v189 = vld [vmem:[%s1 + $0x78] sm:$0xf]
      %v190 = vld [vmem:[%s1 + $0x7c] sm:$0xf]
      %v199 = vunpack.c.l.b16 %v151
      %v200 = vunpack.c.h.b16 %v151
      %v201 = vunpack.c.l.b16 %v152
      %v202 = vunpack.c.h.b16 %v152
      %v203 = vunpack.c.l.b16 %v153
      %v204 = vunpack.c.h.b16 %v153
      %v205 = vunpack.c.l.b16 %v154
      %v206 = vunpack.c.h.b16 %v154
      %v207 = vunpack.c.l.b16 %v155
      %v208 = vunpack.c.h.b16 %v155
      %v209 = vunpack.c.l.b16 %v156
      %v210 = vunpack.c.h.b16 %v156
      %v211 = vunpack.c.l.b16 %v157
      %v212 = vunpack.c.h.b16 %v157
      %v213 = vunpack.c.l.b16 %v158
      %v214 = vunpack.c.h.b16 %v158
      %v215 = vpack.c.b16 %v201, %v199
      %v216 = vpack.c.b16 %v202, %v200
      %v217 = vpack.c.b16 %v205, %v203
      %v218 = vpack.c.b16 %v206, %v204
      %v219 = vpack.c.b16 %v209, %v207
      %v220 = vpack.c.b16 %v210, %v208
      %v221 = vpack.c.b16 %v213, %v211
      %v222 = vpack.c.b16 %v214, %v212
      %v263 = vunpack.c.l.b16 %v159
      %v264 = vunpack.c.l.b16 %v160
      %v265 = vunpack.c.l.b16 %v161
      %v266 = vunpack.c.l.b16 %v162
      %v267 = vunpack.c.l.b16 %v163
      %v268 = vunpack.c.l.b16 %v164
      %v269 = vunpack.c.l.b16 %v165
      %v270 = vunpack.c.l.b16 %v166
      %v271 = vunpack.c.l.b16 %v167
      %v272 = vunpack.c.l.b16 %v168
      %v273 = vunpack.c.l.b16 %v169
      %v274 = vunpack.c.l.b16 %v170
      %v275 = vunpack.c.l.b16 %v171
      %v276 = vunpack.c.l.b16 %v172
      %v277 = vunpack.c.l.b16 %v173
      %v278 = vunpack.c.l.b16 %v174
      %v279 = vunpack.c.l.b16 %v175
      %v280 = vunpack.c.l.b16 %v176
      %v281 = vunpack.c.l.b16 %v177
      %v282 = vunpack.c.l.b16 %v178
      %v283 = vunpack.c.l.b16 %v179
      %v284 = vunpack.c.l.b16 %v180
      %v285 = vunpack.c.l.b16 %v181
      %v286 = vunpack.c.l.b16 %v182
      %v287 = vunpack.c.l.b16 %v183
      %v288 = vunpack.c.l.b16 %v184
      %v289 = vunpack.c.l.b16 %v185
      %v290 = vunpack.c.l.b16 %v186
      %v291 = vunpack.c.l.b16 %v187
      %v292 = vunpack.c.l.b16 %v188
      %v293 = vunpack.c.l.b16 %v189
      %v294 = vunpack.c.l.b16 %v190
      %v295 = vpack.c.b16 %v264, %v263
      %v296 = vpack.c.b16 %v266, %v265
      %v297 = vpack.c.b16 %v268, %v267
      %v298 = vpack.c.b16 %v270, %v269
      %v299 = vpack.c.b16 %v272, %v271
      %v300 = vpack.c.b16 %v274, %v273
      %v301 = vpack.c.b16 %v276, %v275
      %v302 = vpack.c.b16 %v278, %v277
      %v303 = vpack.c.b16 %v280, %v279
      %v304 = vpack.c.b16 %v282, %v281
      %v305 = vpack.c.b16 %v284, %v283
      %v306 = vpack.c.b16 %v286, %v285
      %v307 = vpack.c.b16 %v288, %v287
      %v308 = vpack.c.b16 %v290, %v289
      %v309 = vpack.c.b16 %v292, %v291
      %v310 = vpack.c.b16 %v294, %v293
      %327 = vmatprep.subr.bf16.mxu0 0
      %328 = vmatpush1.bf16.msra.mxu0 %v295
      %329 = vmatprep.subr.bf16.mxu0 0
      %330 = vmatpush1.bf16.msra.mxu0 %v296
      %331 = vmatprep.subr.bf16.mxu0 0
      %332 = vmatpush1.bf16.msra.mxu0 %v297
      %333 = vmatprep.subr.bf16.mxu0 0
      %334 = vmatpush1.bf16.msra.mxu0 %v298
      %335 = vmatprep.subr.bf16.mxu0 0
      %336 = vmatpush1.bf16.msra.mxu0 %v299
      %337 = vmatprep.subr.bf16.mxu0 0
      %338 = vmatpush1.bf16.msra.mxu0 %v300
      %339 = vmatprep.subr.bf16.mxu0 0
      %340 = vmatpush1.bf16.msra.mxu0 %v301
      %341 = vmatprep.subr.bf16.mxu0 0
      %342 = vmatpush1.bf16.msra.mxu0 %v302
      %343 = vmatprep.subr.bf16.mxu0 0
      %344 = vmatpush1.bf16.msra.mxu0 %v303
      %345 = vmatprep.subr.bf16.mxu0 0
      %346 = vmatpush1.bf16.msra.mxu0 %v304
      %347 = vmatprep.subr.bf16.mxu0 0
      %348 = vmatpush1.bf16.msra.mxu0 %v305
      %349 = vmatprep.subr.bf16.mxu0 0
      %350 = vmatpush1.bf16.msra.mxu0 %v306
      %351 = vmatprep.subr.bf16.mxu0 0
      %352 = vmatpush1.bf16.msra.mxu0 %v307
      %353 = vmatprep.subr.bf16.mxu0 0
      %354 = vmatpush1.bf16.msra.mxu0 %v308
      %355 = vmatprep.subr.bf16.mxu0 0
      %356 = vmatpush1.bf16.msra.mxu0 %v309
      %357 = vmatprep.subr.bf16.mxu0 0
      %358 = vmatpush1.bf16.msra.mxu0 %v310
      %359 = vmatprep.mubr.bf16.mxu0 %v216
      %360 = vmatmul.mubr.bf16.gmra.mrb[0].mxu0 %v215
      %v361 = vpop.f32.mrb[0].mxu0
      %v362 = vadd.f32 0.0, %v361
      %v363 = vpop.f32.mrb[0].mxu0
      %v364 = vpop.f32.mrb[0].mxu0
      %v365 = vadd.f32 0.0, %v364
      %v366 = vpop.f32.mrb[0].mxu0
      %367 = vmatprep.mubr.bf16.mxu0 %v218
      %368 = vmatmul.mubr.bf16.gmra.mrb[0].mxu0 %v217
      %v369 = vpop.f32.mrb[0].mxu0
      %v370 = vadd.f32 0.0, %v369
      %v371 = vpop.f32.mrb[0].mxu0
      %v372 = vpop.f32.mrb[0].mxu0
      %v373 = vadd.f32 0.0, %v372
      %v374 = vpop.f32.mrb[0].mxu0
      %375 = vmatprep.mubr.bf16.mxu0 %v220
      %376 = vmatmul.mubr.bf16.gmra.mrb[0].mxu0 %v219
      %v377 = vpop.f32.mrb[0].mxu0
      %v378 = vadd.f32 0.0, %v377
      %v379 = vpop.f32.mrb[0].mxu0
      %v380 = vpop.f32.mrb[0].mxu0
      %v381 = vadd.f32 0.0, %v380
      %v382 = vpop.f32.mrb[0].mxu0
      %383 = vmatprep.mubr.bf16.mxu0 %v222
      %384 = vmatmul.mubr.bf16.gmra.mrb[0].mxu0 %v221
      %v385 = vpop.f32.mrb[0].mxu0
      %v386 = vadd.f32 0.0, %v385
      %v387 = vpop.f32.mrb[0].mxu0
      %v388 = vpop.f32.mrb[0].mxu0
      %v389 = vadd.f32 0.0, %v388
      %v390 = vpop.f32.mrb[0].mxu0
      %391 = vdwg.mxu0
      %v392 = vpack.c.bf16 %v365, %v362
      %v393 = vpack.c.bf16 %v373, %v370
      %v394 = vpack.c.bf16 %v381, %v378
      %v395 = vpack.c.bf16 %v389, %v386
      %v400 = vunpack.c.l.b16 %v392
      %v401 = vunpack.c.h.b16 %v392
      %v402 = vunpack.c.l.b16 %v393
      %v403 = vunpack.c.h.b16 %v393
      %v404 = vunpack.c.l.b16 %v394
      %v405 = vunpack.c.h.b16 %v394
      %v406 = vunpack.c.l.b16 %v395
      %v407 = vunpack.c.h.b16 %v395
      %v408 = vpack.c.b16 %v400, %v400
      %v409 = vpack.c.b16 %v401, %v401
      %v410 = vpack.c.b16 %v402, %v402
      %v411 = vpack.c.b16 %v403, %v403
      %v412 = vpack.c.b16 %v404, %v404
      %v413 = vpack.c.b16 %v405, %v405
      %v414 = vpack.c.b16 %v406, %v406
      %v415 = vpack.c.b16 %v407, %v407
      %424 = vst [vmem:[%s148] sm:$0xf] %v408
      %425 = vst [vmem:[%s148 + $0x4] sm:$0xf] %v409
      %426 = vst [vmem:[%s148 + $0x8] sm:$0xf] %v410
      %427 = vst [vmem:[%s148 + $0xc] sm:$0xf] %v411
      %428 = vst [vmem:[%s148 + $0x10] sm:$0xf] %v412
      %429 = vst [vmem:[%s148 + $0x14] sm:$0xf] %v413
      %430 = vst [vmem:[%s148 + $0x18] sm:$0xf] %v414
      %431 = vst [vmem:[%s148 + $0x1c] sm:$0xf] %v415
      %s432 = smul.u32 8, %s13
      %p433 = scmp.lt.s32.totalorder %s432, 15
      %s434 = scalar_select %p433, %s432, 15
      %s435 = smul.addr %s434, 4
      %s436 = scalar_lea.vmem %s2, %s435
      // Predicated region
      $region29: #{new_model_forward.2} parent=27 // pred_check
        %p437 = pneg %p78
      $region30: #{new_model_forward.2} parent=27 // pred_check_branch
        %439 = sbr.rel (%p437) target = $region32
      $region31: #{new_model_forward.2} parent=27 // pred_region
        %s440 = smul.u32 8, %s13
      $region32: #{new_model_forward.2} parent=27 // pred_fallthru
        _
    $region28: #{new_model_forward.2} parent=5 // pred_fallthru
      _
    %p441 = scmp.le.s32.totalorder 2, %s8
    // Predicated region
    $region33: #{new_model_forward.2} parent=5 // pred_check
      %p442 = pneg %p441
    $region34: #{new_model_forward.2} parent=5 // pred_check_branch
      %444 = sbr.rel (%p442) target = $region36
    $region35: #{new_model_forward.2} parent=5 // pred_region
      %s445 = ssub.s32 %s8, 2
      // Predicated region
      $region37: #{new_model_forward.2} parent=35 // pred_check
        %p446 = pneg %p84
      $region38: #{new_model_forward.2} parent=35 // pred_check_branch
        %448 = sbr.rel (%p446) target = $region40
      $region39: #{new_model_forward.2} parent=35 // pred_region
        %s449 = smul.u32 8, %s14
        %p450 = scmp.lt.s32.totalorder %s449, 15
        %s451 = scalar_select %p450, %s449, 15
        %s452 = smul.addr %s451, 4
        %s453 = scalar_lea.vmem %s2, %s452
      $region40: #{new_model_forward.2} parent=35 // pred_fallthru
        _
    $region36: #{new_model_forward.2} parent=5 // pred_fallthru
      _
  $region6: #{new_model_forward.2} parent=0 // loop_footer
    %s12 = sadd.s32 1, %s8
  $region7: #{new_model_forward.2} parent=0 // loop_footer_branch
    %7 = sbr.rel target = $region3
  $region8: #{new_model_forward.2} parent=0 // loop_exit
    _

// kernel: new_model_forward.3
$region0: #{new_model_forward.3}
  #allocation0 [shape = 'u32[]', space=smem, size = 0x4, offset = 0x4, fixed_abs, tag = 'smem constant byte address 0x4 - core index']
  #allocation1 [shape = 'u32[144,128]{1,0:T(1,128)}', space=vmem, size = 0x12000, scoped, tag = 'internal scratch']
  %s0 = inlined_call_operand.vmem [shape: bf16[2,1,10,10,64], index: 0, kind: input, shape index: {}]
  %s1 = inlined_call_operand.vmem [shape: bf16[576,512], index: 1, kind: input, shape index: {}]
  %s2 = inlined_call_operand.vmem [shape: bf16[512,128], index: 2, kind: input, shape index: {}]
  %s3 = inlined_call_operand.vmem [shape: f32[1,128], index: 3, kind: input, shape index: {}]
  %s4 = inlined_call_operand.vmem [shape: f32[2,1,64,128], index: 4, kind: output, shape index: {}]
  %s5 = sld [smem:[#allocation0]]
  $region49: #{new_model_forward.3} parent=0
    _
  %s7 = ssub.s32 1, %s5
  %s8 = scalar_select 0, %s7, %s5
  loop: start=0, step=1, limit=4
  $region2: #{new_model_forward.3} parent=0 // loop_pre_header
    _
  $region3: #{new_model_forward.3} parent=0 // loop_header
    %s10 = sphi 0, %s14
    %p11 = scmp.ge.s32.totalorder %s10, 4
    %s17 = sphi 0, %s29
    %s18 = sphi 0, %s25
    %s19 = sphi 0, %s17
    %s20 = sphi 0, %s18
    %s21 = sphi 0, %s19
    %s22 = sphi 0, %s20
    %s34 = sphi 0, %s36
    %s37 = sphi 0, %s34
    %s38 = sphi 0, %s37
    %s54 = sphi 0, %s38
    %s58 = sphi 0, %s58
    %s60 = sphi 0, %s58
    %s61 = sphi 0, %s60
    %s75 = sphi 0, %s61
    %s79 = sphi 0, %s79
    %s81 = sphi 0, %s79
    %s82 = sphi 0, %s81
    %s96 = sphi 0, %s82
    %s100 = sphi 0, %s100
    %s102 = sphi 0, %s100
    %s103 = sphi 0, %s102
    %s117 = sphi 0, %s103
    %s125 = sphi 0, %s127
    %s128 = sphi 0, %s125
    %s129 = sphi 0, %s128
    %s145 = sphi 0, %s129
  $region4: #{new_model_forward.3} parent=0 // loop_header_branch
    %13 = sbr.rel (%p11) target = $region8
  $region5: #{new_model_forward.3} parent=0 // loop_body
    %s15 = ssub.s32 %s10, 1
    %s16 = ssub.s32 %s10, 2
    %s23 = sadd.s32 1, %s18
    %p24 = scmp.ge.s32.totalorder %s23, 1
    %s25 = scalar_select %p24, 0, %s23
    %s26 = sadd.s32 1, %s17
    %s27 = scalar_select %p24, %s26, %s17
    %p28 = scmp.ge.s32.totalorder %s27, 2
    %s29 = scalar_select %p28, 0, %s27
    %s30 = ssub.s32 %s17, %s29
    %s31 = ssub.s32 %s18, %s25
    %s32 = sor.u32 %s30, %s31
    %p33 = scmp.eq.s32.totalorder %s32, 0
    %s35 = sadd.s32 %s34, 1
    %s36 = scalar_select %p33, %s34, %s35
    %p39 = pneg %p33
    %p40 = scmp.eq.s32.totalorder %s10, 1
    %p41 = por %p39, %p40
    %p42 = scmp.ne.s32.totalorder %s34, %s37
    %p43 = scmp.eq.s32.totalorder %s10, 0
    %p44 = por %p42, %p43
    %p45 = scmp.ne.s32.totalorder %s34, %s37
    %p46 = scmp.eq.s32.totalorder %s15, 1
    %p47 = por %p45, %p46
    %p48 = scmp.ne.s32.totalorder %s37, %s38
    %p49 = scmp.eq.s32.totalorder %s15, 0
    %p50 = por %p48, %p49
    %p51 = scmp.ne.s32.totalorder %s37, %s38
    %p52 = scmp.eq.s32.totalorder %s16, 1
    %p53 = por %p51, %p52
    %p55 = scmp.ne.s32.totalorder %s38, %s54
    %p56 = scmp.eq.s32.totalorder %s16, 0
    %p57 = por %p55, %p56
    %s59 = sadd.s32 %s58, 1
    %p62 = scmp.eq.s32.totalorder %s10, 1
    %p63 = scmp.ne.s32.totalorder %s58, %s60
    %p64 = scmp.eq.s32.totalorder %s10, 0
    %p65 = por %p63, %p64
    %p66 = scmp.ne.s32.totalorder %s58, %s60
    %p67 = scmp.eq.s32.totalorder %s15, 1
    %p68 = por %p66, %p67
    %p69 = scmp.ne.s32.totalorder %s60, %s61
    %p70 = scmp.eq.s32.totalorder %s15, 0
    %p71 = por %p69, %p70
    %p72 = scmp.ne.s32.totalorder %s60, %s61
    %p73 = scmp.eq.s32.totalorder %s16, 1
    %p74 = por %p72, %p73
    %p76 = scmp.ne.s32.totalorder %s61, %s75
    %p77 = scmp.eq.s32.totalorder %s16, 0
    %p78 = por %p76, %p77
    %s80 = sadd.s32 %s79, 1
    %p83 = scmp.eq.s32.totalorder %s10, 1
    %p84 = scmp.ne.s32.totalorder %s79, %s81
    %p85 = scmp.eq.s32.totalorder %s10, 0
    %p86 = por %p84, %p85
    %p87 = scmp.ne.s32.totalorder %s79, %s81
    %p88 = scmp.eq.s32.totalorder %s15, 1
    %p89 = por %p87, %p88
    %p90 = scmp.ne.s32.totalorder %s81, %s82
    %p91 = scmp.eq.s32.totalorder %s15, 0
    %p92 = por %p90, %p91
    %p93 = scmp.ne.s32.totalorder %s81, %s82
    %p94 = scmp.eq.s32.totalorder %s16, 1
    %p95 = por %p93, %p94
    %p97 = scmp.ne.s32.totalorder %s82, %s96
    %p98 = scmp.eq.s32.totalorder %s16, 0
    %p99 = por %p97, %p98
    %s101 = sadd.s32 %s100, 1
    %p104 = scmp.eq.s32.totalorder %s10, 1
    %p105 = scmp.ne.s32.totalorder %s100, %s102
    %p106 = scmp.eq.s32.totalorder %s10, 0
    %p107 = por %p105, %p106
    %p108 = scmp.ne.s32.totalorder %s100, %s102
    %p109 = scmp.eq.s32.totalorder %s15, 1
    %p110 = por %p108, %p109
    %p111 = scmp.ne.s32.totalorder %s102, %s103
    %p112 = scmp.eq.s32.totalorder %s15, 0
    %p113 = por %p111, %p112
    %p114 = scmp.ne.s32.totalorder %s102, %s103
    %p115 = scmp.eq.s32.totalorder %s16, 1
    %p116 = por %p114, %p115
    %p118 = scmp.ne.s32.totalorder %s103, %s117
    %p119 = scmp.eq.s32.totalorder %s16, 0
    %p120 = por %p118, %p119
    %s121 = ssub.s32 %s17, %s29
    %s122 = ssub.s32 %s18, %s25
    %s123 = sor.u32 %s121, %s122
    %p124 = scmp.eq.s32.totalorder %s123, 0
    %s126 = sadd.s32 %s125, 1
    %s127 = scalar_select %p124, %s125, %s126
    %p130 = pneg %p124
    %p131 = scmp.eq.s32.totalorder %s10, 1
    %p132 = por %p130, %p131
    %p133 = scmp.ne.s32.totalorder %s125, %s128
    %p134 = scmp.eq.s32.totalorder %s10, 0
    %p135 = por %p133, %p134
    %p136 = scmp.ne.s32.totalorder %s125, %s128
    %p137 = scmp.eq.s32.totalorder %s15, 1
    %p138 = por %p136, %p137
    %p139 = scmp.ne.s32.totalorder %s128, %s129
    %p140 = scmp.eq.s32.totalorder %s15, 0
    %p141 = por %p139, %p140
    %p142 = scmp.ne.s32.totalorder %s128, %s129
    %p143 = scmp.eq.s32.totalorder %s16, 1
    %p144 = por %p142, %p143
    %p146 = scmp.ne.s32.totalorder %s129, %s145
    %p147 = scmp.eq.s32.totalorder %s16, 0
    %p148 = por %p146, %p147
    %p149 = scmp.le.s32.totalorder 1, %s10
    %p150 = scmp.lt.s32.totalorder %s10, 3
    %p151 = pnand %p149, %p150
    %p152 = pneg %p151
    // Predicated region
    $region9: #{new_model_forward.3} parent=5 // pred_check
      _
    $region10: #{new_model_forward.3} parent=5 // pred_check_branch
      %154 = sbr.rel (%p151) target = $region12
    $region11: #{new_model_forward.3} parent=5 // pred_region
      %s155 = ssub.s32 %s10, 1
      // Predicated region
      $region13: #{new_model_forward.3} parent=11 // pred_check
        %p156 = pneg %p71
      $region14: #{new_model_forward.3} parent=11 // pred_check_branch
        %158 = sbr.rel (%p156) target = $region16
      $region15: #{new_model_forward.3} parent=11 // pred_region
        _
      $region16: #{new_model_forward.3} parent=11 // pred_fallthru
        _
      // Predicated region
      $region17: #{new_model_forward.3} parent=11 // pred_check
        %p159 = pneg %p92
      $region18: #{new_model_forward.3} parent=11 // pred_check_branch
        %161 = sbr.rel (%p159) target = $region20
      $region19: #{new_model_forward.3} parent=11 // pred_region
        _
      $region20: #{new_model_forward.3} parent=11 // pred_fallthru
        _
      // Predicated region
      $region21: #{new_model_forward.3} parent=11 // pred_check
        %p162 = pneg %p113
      $region22: #{new_model_forward.3} parent=11 // pred_check_branch
        %164 = sbr.rel (%p162) target = $region24
      $region23: #{new_model_forward.3} parent=11 // pred_region
        _
      $region24: #{new_model_forward.3} parent=11 // pred_fallthru
        _
    $region12: #{new_model_forward.3} parent=5 // pred_fallthru
      _
    %p165 = scmp.lt.s32.totalorder %s10, 2
    // Predicated region
    $region25: #{new_model_forward.3} parent=5 // pred_check
      %p166 = pneg %p165
    $region26: #{new_model_forward.3} parent=5 // pred_check_branch
      %168 = sbr.rel (%p166) target = $region28
    $region27: #{new_model_forward.3} parent=5 // pred_region
      // Predicated region
      $region29: #{new_model_forward.3} parent=27 // pred_check
        %p169 = pneg %p44
      $region30: #{new_model_forward.3} parent=27 // pred_check_branch
        %171 = sbr.rel (%p169) target = $region32
      $region31: #{new_model_forward.3} parent=27 // pred_region
        %p172 = scmp.lt.s32.totalorder %s17, 1
        %s173 = scalar_select %p172, %s17, 1
        %p174 = scmp.lt.s32.totalorder %s18, 0
        %s175 = scalar_select %p174, %s18, 0
        %s176 = smul.addr %s175, 20
        %s177 = smul.addr %s173, 20
        %s178 = sadd.s32 %s176, %s177
        %s179 = smul.addr %s178, 4
        %s180 = scalar_lea.vmem %s0, %s179
      $region32: #{new_model_forward.3} parent=27 // pred_fallthru
        _
    $region28: #{new_model_forward.3} parent=5 // pred_fallthru
      _
    %p181 = scmp.le.s32.totalorder 1, %s10
    %p182 = scmp.lt.s32.totalorder %s10, 3
    %p183 = pnand %p181, %p182
    %p184 = pneg %p183
    // Predicated region
    $region33: #{new_model_forward.3} parent=5 // pred_check
      _
    $region34: #{new_model_forward.3} parent=5 // pred_check_branch
      %186 = sbr.rel (%p183) target = $region36
    $region35: #{new_model_forward.3} parent=5 // pred_region
      %s187 = ssub.s32 %s10, 1
      %p188 = scmp.lt.s32.totalorder %s19, 1
      %s189 = scalar_select %p188, %s19, 1
      %p190 = scmp.lt.s32.totalorder %s20, 0
      %s191 = scalar_select %p190, %s20, 0
      %s192 = smul.addr %s191, 20
      %s193 = smul.addr %s189, 20
      %s194 = sadd.s32 %s192, %s193
      %s195 = smul.addr %s194, 4
      %s196 = scalar_lea.vmem %s0, %s195
      %p197 = pneg %p50
      %p198 = pneg %p47
      %p199 = pneg %p71
      %p200 = pneg %p68
      %p201 = pneg %p92
      %p202 = pneg %p89
      %p203 = pneg %p113
      %p204 = pneg %p110
      %p205 = pneg %p141
      %p206 = pneg %p138
      %p207 = scmp.lt.s32.totalorder %s19, 1
      %s208 = scalar_select %p207, %s19, 1
      %p209 = scmp.lt.s32.totalorder %s20, 0
      %s210 = scalar_select %p209, %s20, 0
      %s211 = smul.addr %s210, 8
      %s212 = smul.addr %s208, 8
      %s213 = sadd.s32 %s211, %s212
      %s214 = smul.addr %s213, 8
      %s215 = scalar_lea.vmem %s4, %s214
      %p216 = scmp.lt.s32.totalorder %s19, 1
      %s217 = scalar_select %p216, %s19, 1
      %p218 = scmp.lt.s32.totalorder %s20, 0
      %s219 = scalar_select %p218, %s20, 0
      %s220 = smul.addr %s219, 20
      %s221 = smul.addr %s217, 20
      %s222 = sadd.s32 %s220, %s221
      %s223 = smul.addr %s222, 4
      %s224 = scalar_lea.vmem %s0, %s223
      %p225 = scmp.lt.s32.totalorder %s19, 1
      %s226 = scalar_select %p225, %s19, 1
      %p227 = scmp.lt.s32.totalorder %s20, 0
      %s228 = scalar_select %p227, %s20, 0
      %s229 = smul.addr %s228, 8
      %s230 = smul.addr %s226, 8
      %s231 = sadd.s32 %s229, %s230
      %s232 = smul.addr %s231, 8
      %s233 = scalar_lea.vmem %s4, %s232
      %v235 = vld [vmem:[%s224] sm:$0xf]
      %v236 = vld [vmem:[%s224 + $0x4] sm:$0x1]
      %v237 = vld [vmem:[%s224 + $0x8] sm:$0xf]
      %v238 = vld [vmem:[%s224 + $0xc] sm:$0x1]
      %v239 = vld [vmem:[%s224 + $0x10] sm:$0xf]
      %v240 = vld [vmem:[%s224 + $0x14] sm:$0x1]
      %v241 = vld [vmem:[%s224 + $0x18] sm:$0xf]
      %v242 = vld [vmem:[%s224 + $0x1c] sm:$0x1]
      %v243 = vld [vmem:[%s224 + $0x20] sm:$0xf]
      %v244 = vld [vmem:[%s224 + $0x24] sm:$0x1]
      %v245 = vld [vmem:[%s224 + $0x28] sm:$0xf]
      %v246 = vld [vmem:[%s224 + $0x2c] sm:$0x1]
      %v247 = vld [vmem:[%s224 + $0x30] sm:$0xf]
      %v248 = vld [vmem:[%s224 + $0x34] sm:$0x1]
      %v249 = vld [vmem:[%s224 + $0x38] sm:$0xf]
      %v250 = vld [vmem:[%s224 + $0x3c] sm:$0x1]
      %v251 = vld [vmem:[%s224 + $0x40] sm:$0xf]
      %v252 = vld [vmem:[%s224 + $0x44] sm:$0x1]
      %v253 = vld [vmem:[%s224 + $0x48] sm:$0xf]
      %v254 = vld [vmem:[%s224 + $0x4c] sm:$0x1]
      %v271 = vunpack.c.l.b16 %v235
      %v272 = vunpack.c.l.b16 %v236
      %v273 = vunpack.c.l.b16 %v237
      %v274 = vunpack.c.l.b16 %v238
      %v275 = vunpack.c.l.b16 %v239
      %v276 = vunpack.c.l.b16 %v240
      %v277 = vunpack.c.l.b16 %v241
      %v278 = vunpack.c.l.b16 %v242
      %v279 = vunpack.c.l.b16 %v243
      %v280 = vunpack.c.l.b16 %v244
      %v281 = vunpack.c.l.b16 %v245
      %v282 = vunpack.c.l.b16 %v246
      %v283 = vunpack.c.l.b16 %v247
      %v284 = vunpack.c.l.b16 %v248
      %v285 = vunpack.c.l.b16 %v249
      %v286 = vunpack.c.l.b16 %v250
      %v287 = vpack.c.b16 %v272, %v271
      %v288 = vpack.c.b16 %v274, %v273
      %v289 = vpack.c.b16 %v276, %v275
      %v290 = vpack.c.b16 %v278, %v277
      %v291 = vpack.c.b16 %v280, %v279
      %v292 = vpack.c.b16 %v282, %v281
      %v293 = vpack.c.b16 %v284, %v283
      %v294 = vpack.c.b16 %v286, %v285
      %v296 = vshrl.u32 %v287, 16
      %v298 = vshll.u32 %v287, 16
      %v300 = vrot.slane %v298, 1
      %v301 = vor.u32 %v296, %v300
      %v303 = vshrl.u32 %v288, 16
      %v305 = vshll.u32 %v288, 16
      %v307 = vrot.slane %v305, 1
      %v308 = vor.u32 %v303, %v307
      %v310 = vshrl.u32 %v289, 16
      %v312 = vshll.u32 %v289, 16
      %v314 = vrot.slane %v312, 1
      %v315 = vor.u32 %v310, %v314
      %v317 = vshrl.u32 %v290, 16
      %v319 = vshll.u32 %v290, 16
      %v321 = vrot.slane %v319, 1
      %v322 = vor.u32 %v317, %v321
      %v324 = vshrl.u32 %v291, 16
      %v326 = vshll.u32 %v291, 16
      %v328 = vrot.slane %v326, 1
      %v329 = vor.u32 %v324, %v328
      %v331 = vshrl.u32 %v292, 16
      %v333 = vshll.u32 %v292, 16
      %v335 = vrot.slane %v333, 1
      %v336 = vor.u32 %v331, %v335
      %v338 = vshrl.u32 %v293, 16
      %v340 = vshll.u32 %v293, 16
      %v342 = vrot.slane %v340, 1
      %v343 = vor.u32 %v338, %v342
      %v345 = vshrl.u32 %v294, 16
      %v347 = vshll.u32 %v294, 16
      %v349 = vrot.slane %v347, 1
      %v350 = vor.u32 %v345, %v349
      %351 = vrot.lane.b32.xlu0 %v301, 64
      %v352 = vpop.permute.xlu0 %351
      %353 = vrot.lane.b32.xlu0 %v308, 64
      %v354 = vpop.permute.xlu0 %353
      %355 = vrot.lane.b32.xlu0 %v315, 64
      %v356 = vpop.permute.xlu0 %355
      %357 = vrot.lane.b32.xlu0 %v322, 64
      %v358 = vpop.permute.xlu0 %357
      %359 = vrot.lane.b32.xlu0 %v329, 64
      %v360 = vpop.permute.xlu0 %359
      %361 = vrot.lane.b32.xlu0 %v336, 64
      %v362 = vpop.permute.xlu0 %361
      %363 = vrot.lane.b32.xlu0 %v343, 64
      %v364 = vpop.permute.xlu0 %363
      %365 = vrot.lane.b32.xlu0 %v350, 64
      %v366 = vpop.permute.xlu0 %365
      %v367 = vrot.slane %v287, 1
      %v368 = vrot.slane %v288, 1
      %v369 = vrot.slane %v289, 1
      %v370 = vrot.slane %v290, 1
      %v371 = vrot.slane %v291, 1
      %v372 = vrot.slane %v292, 1
      %v373 = vrot.slane %v293, 1
      %v374 = vrot.slane %v294, 1
      %v376 = vunpack.c.l.b16 %v251
      %v377 = vpack.c.b16 %v273, %v273
      %v378 = vpack.c.b16 %v275, %v275
      %v379 = vpack.c.b16 %v277, %v277
      %v380 = vpack.c.b16 %v279, %v279
      %v381 = vpack.c.b16 %v281, %v281
      %v382 = vpack.c.b16 %v283, %v283
      %v383 = vpack.c.b16 %v285, %v285
      %v384 = vpack.c.b16 %v376, %v376
      %385 = vrot.lane.b32.xlu0 %v377, 64
      %v386 = vpop.permute.xlu0 %385
      %387 = vrot.lane.b32.xlu0 %v378, 64
      %v388 = vpop.permute.xlu0 %387
      %389 = vrot.lane.b32.xlu0 %v379, 64
      %v390 = vpop.permute.xlu0 %389
      %391 = vrot.lane.b32.xlu0 %v380, 64
      %v392 = vpop.permute.xlu0 %391
      %393 = vrot.lane.b32.xlu0 %v381, 64
      %v394 = vpop.permute.xlu0 %393
      %395 = vrot.lane.b32.xlu0 %v382, 64
      %v396 = vpop.permute.xlu0 %395
      %397 = vrot.lane.b32.xlu0 %v383, 64
      %v398 = vpop.permute.xlu0 %397
      %399 = vrot.lane.b32.xlu0 %v384, 64
      %v400 = vpop.permute.xlu0 %399
      %v402 = vunpack.c.l.b16 %v252
      %v403 = vpack.c.b16 %v402, %v376
      %v405 = vshrl.u32 %v403, 16
      %v407 = vshll.u32 %v403, 16
      %v409 = vrot.slane %v407, 1
      %v410 = vor.u32 %v405, %v409
      %v411 = vrot.slane %v403, 1
      %412 = vrot.lane.b32.xlu0 %v368, 64
      %v413 = vpop.permute.xlu0 %412
      %414 = vrot.lane.b32.xlu0 %v369, 64
      %v415 = vpop.permute.xlu0 %414
      %416 = vrot.lane.b32.xlu0 %v370, 64
      %v417 = vpop.permute.xlu0 %416
      %418 = vrot.lane.b32.xlu0 %v371, 64
      %v419 = vpop.permute.xlu0 %418
      %420 = vrot.lane.b32.xlu0 %v372, 64
      %v421 = vpop.permute.xlu0 %420
      %422 = vrot.lane.b32.xlu0 %v373, 64
      %v423 = vpop.permute.xlu0 %422
      %424 = vrot.lane.b32.xlu0 %v374, 64
      %v425 = vpop.permute.xlu0 %424
      %426 = vrot.lane.b32.xlu0 %v411, 64
      %v427 = vpop.permute.xlu0 %426
      %v430 = vunpack.c.l.b16 %v253
      %v431 = vunpack.c.l.b16 %v254
      %v432 = vpack.c.b16 %v431, %v430
      %v434 = vshrl.u32 %v432, 16
      %v436 = vshll.u32 %v432, 16
      %v438 = vrot.slane %v436, 1
      %v439 = vor.u32 %v434, %v438
      %440 = vrot.lane.b32.xlu0 %v410, 64
      %v441 = vpop.permute.xlu0 %440
      %442 = vrot.lane.b32.xlu0 %v439, 64
      %v443 = vpop.permute.xlu0 %442
      %v444 = vrot.slane %v432, 1
      %vm445 = vcmask 523264
      %v448 = vsel %vm445, %v235, %v352
      %v451 = vsel %vm445, %v237, %v354
      %v454 = vsel %vm445, %v239, %v356
      %v457 = vsel %vm445, %v241, %v358
      %v460 = vsel %vm445, %v243, %v360
      %v463 = vsel %vm445, %v245, %v362
      %v466 = vsel %vm445, %v247, %v364
      %v469 = vsel %vm445, %v249, %v366
      %v472 = vsel %vm445, %v367, %v386
      %v475 = vsel %vm445, %v368, %v388
      %v478 = vsel %vm445, %v369, %v390
      %v481 = vsel %vm445, %v370, %v392
      %v484 = vsel %vm445, %v371, %v394
      %v487 = vsel %vm445, %v372, %v396
      %v490 = vsel %vm445, %v373, %v398
      %v493 = vsel %vm445, %v374, %v400
      %v496 = vsel %vm445, %v308, %v413
      %v499 = vsel %vm445, %v315, %v415
      %v502 = vsel %vm445, %v322, %v417
      %v505 = vsel %vm445, %v329, %v419
      %v508 = vsel %vm445, %v336, %v421
      %v511 = vsel %vm445, %v343, %v423
      %v514 = vsel %vm445, %v350, %v425
      %v517 = vsel %vm445, %v410, %v427
      %v520 = vsel %vm445, %v251, %v441
      %v523 = vsel %vm445, %v253, %v443
      %v550 = vunpack.c.l.b16 %v448
      %v551 = vunpack.c.l.b16 %v472
      %v552 = vunpack.c.l.b16 %v496
      %v553 = vunpack.c.l.b16 %v454
      %v554 = vunpack.c.l.b16 %v369
      %v555 = vunpack.c.l.b16 %v451
      %v556 = vunpack.c.l.b16 %v475
      %v557 = vunpack.c.l.b16 %v499
      %v558 = vunpack.c.l.b16 %v457
      %v559 = vunpack.c.l.b16 %v370
      %v560 = vunpack.c.l.b16 %v478
      %v561 = vunpack.c.l.b16 %v502
      %v562 = vunpack.c.l.b16 %v460
      %v563 = vunpack.c.l.b16 %v371
      %v564 = vunpack.c.l.b16 %v481
      %v565 = vunpack.c.l.b16 %v505
      %v566 = vunpack.c.l.b16 %v463
      %v567 = vunpack.c.l.b16 %v372
      %v568 = vunpack.c.l.b16 %v484
      %v569 = vunpack.c.l.b16 %v508
      %v570 = vunpack.c.l.b16 %v466
      %v571 = vunpack.c.l.b16 %v373
      %v572 = vunpack.c.l.b16 %v487
      %v573 = vunpack.c.l.b16 %v511
      %v574 = vunpack.c.l.b16 %v469
      %v575 = vunpack.c.l.b16 %v374
      %v576 = vunpack.c.l.b16 %v490
      %v577 = vunpack.c.l.b16 %v514
      %v578 = vunpack.c.l.b16 %v520
      %v579 = vunpack.c.l.b16 %v411
      %v580 = vunpack.c.l.b16 %v493
      %v581 = vunpack.c.l.b16 %v517
      %v582 = vunpack.c.l.b16 %v523
      %v583 = vunpack.c.l.b16 %v444
      %v584 = vld [vmem:[%s1] sm:$0xff]
      %v585 = vld [vmem:[%s1 + $0x8] sm:$0xff]
      %v586 = vld [vmem:[%s1 + $0x10] sm:$0xff]
      %v587 = vld [vmem:[%s1 + $0x18] sm:$0xff]
      %v588 = vld [vmem:[%s1 + $0x20] sm:$0xff]
      %v589 = vld [vmem:[%s1 + $0x28] sm:$0xff]
      %v590 = vld [vmem:[%s1 + $0x30] sm:$0xff]
      %v591 = vld [vmem:[%s1 + $0x38] sm:$0xff]
      %v592 = vld [vmem:[%s1 + $0x40] sm:$0xff]
      %v593 = vld [vmem:[%s1 + $0x48] sm:$0xff]
      %v594 = vld [vmem:[%s1 + $0x50] sm:$0xff]
      %v595 = vld [vmem:[%s1 + $0x58] sm:$0xff]
      %v596 = vld [vmem:[%s1 + $0x60] sm:$0xff]
      %v597 = vld [vmem:[%s1 + $0x68] sm:$0xff]
      %v598 = vld [vmem:[%s1 + $0x70] sm:$0xff]
      %v599 = vld [vmem:[%s1 + $0x78] sm:$0xff]
      %v600 = vld [vmem:[%s1 + $0x80] sm:$0xff]
      %v601 = vld [vmem:[%s1 + $0x88] sm:$0xff]
      %v602 = vld [vmem:[%s1 + $0x90] sm:$0xff]
      %v603 = vld [vmem:[%s1 + $0x98] sm:$0xff]
      %v604 = vld [vmem:[%s1 + $0xa0] sm:$0xff]
      %v605 = vld [vmem:[%s1 + $0xa8] sm:$0xff]
      %v606 = vld [vmem:[%s1 + $0xb0] sm:$0xff]
      %v607 = vld [vmem:[%s1 + $0xb8] sm:$0xff]
      %v608 = vld [vmem:[%s1 + $0xc0] sm:$0xff]
      %v609 = vld [vmem:[%s1 + $0xc8] sm:$0xff]
      %v610 = vld [vmem:[%s1 + $0xd0] sm:$0xff]
      %v611 = vld [vmem:[%s1 + $0xd8] sm:$0xff]
      %v612 = vld [vmem:[%s1 + $0xe0] sm:$0xff]
      %v613 = vld [vmem:[%s1 + $0xe8] sm:$0xff]
      %v614 = vld [vmem:[%s1 + $0xf0] sm:$0xff]
      %v615 = vld [vmem:[%s1 + $0xf8] sm:$0xff]
      %v616 = vld [vmem:[%s1 + $0x100] sm:$0xff]
      %v617 = vld [vmem:[%s1 + $0x108] sm:$0xff]
      %v618 = vld [vmem:[%s1 + $0x110] sm:$0xff]
      %v619 = vld [vmem:[%s1 + $0x118] sm:$0xff]
      %v620 = vld [vmem:[%s1 + $0x120] sm:$0xff]
      %v621 = vld [vmem:[%s1 + $0x128] sm:$0xff]
      %v622 = vld [vmem:[%s1 + $0x130] sm:$0xff]
      %v623 = vld [vmem:[%s1 + $0x138] sm:$0xff]
      %v624 = vld [vmem:[%s1 + $0x140] sm:$0xff]
      %v625 = vld [vmem:[%s1 + $0x148] sm:$0xff]
      %v626 = vld [vmem:[%s1 + $0x150] sm:$0xff]
      %v627 = vld [vmem:[%s1 + $0x158] sm:$0xff]
      %v628 = vld [vmem:[%s1 + $0x160] sm:$0xff]
      %v629 = vld [vmem:[%s1 + $0x168] sm:$0xff]
      %v630 = vld [vmem:[%s1 + $0x170] sm:$0xff]
      %v631 = vld [vmem:[%s1 + $0x178] sm:$0xff]
      %v632 = vld [vmem:[%s1 + $0x180] sm:$0xff]
      %v633 = vld [vmem:[%s1 + $0x188] sm:$0xff]
      %v634 = vld [vmem:[%s1 + $0x190] sm:$0xff]
      %v635 = vld [vmem:[%s1 + $0x198] sm:$0xff]
      %v636 = vld [vmem:[%s1 + $0x1a0] sm:$0xff]
      %v637 = vld [vmem:[%s1 + $0x1a8] sm:$0xff]
      %v638 = vld [vmem:[%s1 + $0x1b0] sm:$0xff]
      %v639 = vld [vmem:[%s1 + $0x1b8] sm:$0xff]
      %v640 = vld [vmem:[%s1 + $0x1c0] sm:$0xff]
      %v641 = vld [vmem:[%s1 + $0x1c8] sm:$0xff]
      %v642 = vld [vmem:[%s1 + $0x1d0] sm:$0xff]
      %v643 = vld [vmem:[%s1 + $0x1d8] sm:$0xff]
      %v644 = vld [vmem:[%s1 + $0x1e0] sm:$0xff]
      %v645 = vld [vmem:[%s1 + $0x1e8] sm:$0xff]
      %v646 = vld [vmem:[%s1 + $0x1f0] sm:$0xff]
      %v647 = vld [vmem:[%s1 + $0x1f8] sm:$0xff]
      %v648 = vld [vmem:[%s1 + $0x200] sm:$0xff]
      %v649 = vld [vmem:[%s1 + $0x208] sm:$0xff]
      %v650 = vld [vmem:[%s1 + $0x210] sm:$0xff]
      %v651 = vld [vmem:[%s1 + $0x218] sm:$0xff]
      %v652 = vld [vmem:[%s1 + $0x220] sm:$0xff]
      %v653 = vld [vmem:[%s1 + $0x228] sm:$0xff]
      %v654 = vld [vmem:[%s1 + $0x230] sm:$0xff]
      %v655 = vld [vmem:[%s1 + $0x238] sm:$0xff]
      %v656 = vld [vmem:[%s1 + $0x240] sm:$0xff]
      %v657 = vld [vmem:[%s1 + $0x248] sm:$0xff]
      %v658 = vld [vmem:[%s1 + $0x250] sm:$0xff]
      %v659 = vld [vmem:[%s1 + $0x258] sm:$0xff]
      %v660 = vld [vmem:[%s1 + $0x260] sm:$0xff]
      %v661 = vld [vmem:[%s1 + $0x268] sm:$0xff]
      %v662 = vld [vmem:[%s1 + $0x270] sm:$0xff]
      %v663 = vld [vmem:[%s1 + $0x278] sm:$0xff]
      %v664 = vld [vmem:[%s1 + $0x280] sm:$0xff]
      %v665 = vld [vmem:[%s1 + $0x288] sm:$0xff]
      %v666 = vld [vmem:[%s1 + $0x290] sm:$0xff]
      %v667 = vld [vmem:[%s1 + $0x298] sm:$0xff]
      %v668 = vld [vmem:[%s1 + $0x2a0] sm:$0xff]
      %v669 = vld [vmem:[%s1 + $0x2a8] sm:$0xff]
      %v670 = vld [vmem:[%s1 + $0x2b0] sm:$0xff]
      %v671 = vld [vmem:[%s1 + $0x2b8] sm:$0xff]
      %v672 = vld [vmem:[%s1 + $0x2c0] sm:$0xff]
      %v673 = vld [vmem:[%s1 + $0x2c8] sm:$0xff]
      %v674 = vld [vmem:[%s1 + $0x2d0] sm:$0xff]
      %v675 = vld [vmem:[%s1 + $0x2d8] sm:$0xff]
      %v676 = vld [vmem:[%s1 + $0x2e0] sm:$0xff]
      %v677 = vld [vmem:[%s1 + $0x2e8] sm:$0xff]
      %v678 = vld [vmem:[%s1 + $0x2f0] sm:$0xff]
      %v679 = vld [vmem:[%s1 + $0x2f8] sm:$0xff]
      %v680 = vld [vmem:[%s1 + $0x300] sm:$0xff]
      %v681 = vld [vmem:[%s1 + $0x308] sm:$0xff]
      %v682 = vld [vmem:[%s1 + $0x310] sm:$0xff]
      %v683 = vld [vmem:[%s1 + $0x318] sm:$0xff]
      %v684 = vld [vmem:[%s1 + $0x320] sm:$0xff]
      %v685 = vld [vmem:[%s1 + $0x328] sm:$0xff]
      %v686 = vld [vmem:[%s1 + $0x330] sm:$0xff]
      %v687 = vld [vmem:[%s1 + $0x338] sm:$0xff]
      %v688 = vld [vmem:[%s1 + $0x340] sm:$0xff]
      %v689 = vld [vmem:[%s1 + $0x348] sm:$0xff]
      %v690 = vld [vmem:[%s1 + $0x350] sm:$0xff]
      %v691 = vld [vmem:[%s1 + $0x358] sm:$0xff]
      %v692 = vld [vmem:[%s1 + $0x360] sm:$0xff]
      %v693 = vld [vmem:[%s1 + $0x368] sm:$0xff]
      %v694 = vld [vmem:[%s1 + $0x370] sm:$0xff]
      %v695 = vld [vmem:[%s1 + $0x378] sm:$0xff]
      %v696 = vld [vmem:[%s1 + $0x380] sm:$0xff]
      %v697 = vld [vmem:[%s1 + $0x388] sm:$0xff]
      %v698 = vld [vmem:[%s1 + $0x390] sm:$0xff]
      %v699 = vld [vmem:[%s1 + $0x398] sm:$0xff]
      %v700 = vld [vmem:[%s1 + $0x3a0] sm:$0xff]
      %v701 = vld [vmem:[%s1 + $0x3a8] sm:$0xff]
      %v702 = vld [vmem:[%s1 + $0x3b0] sm:$0xff]
      %v703 = vld [vmem:[%s1 + $0x3b8] sm:$0xff]
      %v704 = vld [vmem:[%s1 + $0x3c0] sm:$0xff]
      %v705 = vld [vmem:[%s1 + $0x3c8] sm:$0xff]
      %v706 = vld [vmem:[%s1 + $0x3d0] sm:$0xff]
      %v707 = vld [vmem:[%s1 + $0x3d8] sm:$0xff]
      %v708 = vld [vmem:[%s1 + $0x3e0] sm:$0xff]
      %v709 = vld [vmem:[%s1 + $0x3e8] sm:$0xff]
      %v710 = vld [vmem:[%s1 + $0x3f0] sm:$0xff]
      %v711 = vld [vmem:[%s1 + $0x3f8] sm:$0xff]
      %v712 = vld [vmem:[%s1 + $0x400] sm:$0xff]
      %v713 = vld [vmem:[%s1 + $0x408] sm:$0xff]
      %v714 = vld [vmem:[%s1 + $0x410] sm:$0xff]
      %v715 = vld [vmem:[%s1 + $0x418] sm:$0xff]
      %v716 = vld [vmem:[%s1 + $0x420] sm:$0xff]
      %v717 = vld [vmem:[%s1 + $0x428] sm:$0xff]
      %v718 = vld [vmem:[%s1 + $0x430] sm:$0xff]
      %v719 = vld [vmem:[%s1 + $0x438] sm:$0xff]
      %v720 = vld [vmem:[%s1 + $0x440] sm:$0xff]
      %v721 = vld [vmem:[%s1 + $0x448] sm:$0xff]
      %v722 = vld [vmem:[%s1 + $0x450] sm:$0xff]
      %v723 = vld [vmem:[%s1 + $0x458] sm:$0xff]
      %v724 = vld [vmem:[%s1 + $0x460] sm:$0xff]
      %v725 = vld [vmem:[%s1 + $0x468] sm:$0xff]
      %v726 = vld [vmem:[%s1 + $0x470] sm:$0xff]
      %v727 = vld [vmem:[%s1 + $0x478] sm:$0xff]
      %v728 = vpack.c.b16 %v555, %v550
      %v729 = vpack.c.b16 %v556, %v551
      %v730 = vpack.c.b16 %v557, %v552
      %v731 = vpack.c.b16 %v558, %v553
      %v732 = vpack.c.b16 %v559, %v554
      %v733 = vpack.c.b16 %v564, %v560
      %v734 = vpack.c.b16 %v565, %v561
      %v735 = vpack.c.b16 %v566, %v562
      %v736 = vpack.c.b16 %v567, %v563
      %v737 = vpack.c.b16 %v572, %v568
      %v738 = vpack.c.b16 %v573, %v569
      %v739 = vpack.c.b16 %v574, %v570
      %v740 = vpack.c.b16 %v575, %v571
      %v741 = vpack.c.b16 %v580, %v576
      %v742 = vpack.c.b16 %v581, %v577
      %v743 = vpack.c.b16 %v582, %v578
      %v744 = vpack.c.b16 %v583, %v579
      %v902 = vunpack.c.l.b16 %v584
      %v903 = vunpack.c.h.b16 %v584
      %v904 = vunpack.c.l.b16 %v585
      %v905 = vunpack.c.h.b16 %v585
      %v906 = vunpack.c.l.b16 %v586
      %v907 = vunpack.c.h.b16 %v586
      %v908 = vunpack.c.l.b16 %v587
      %v909 = vunpack.c.h.b16 %v587
      %v910 = vunpack.c.l.b16 %v588
      %v911 = vunpack.c.h.b16 %v588
      %v912 = vunpack.c.l.b16 %v589
      %v913 = vunpack.c.h.b16 %v589
      %v914 = vunpack.c.l.b16 %v590
      %v915 = vunpack.c.h.b16 %v590
      %v916 = vunpack.c.l.b16 %v591
      %v917 = vunpack.c.h.b16 %v591
      %v918 = vunpack.c.l.b16 %v592
      %v919 = vunpack.c.h.b16 %v592
      %v920 = vunpack.c.l.b16 %v593
      %v921 = vunpack.c.h.b16 %v593
      %v922 = vunpack.c.l.b16 %v594
      %v923 = vunpack.c.h.b16 %v594
      %v924 = vunpack.c.l.b16 %v595
      %v925 = vunpack.c.h.b16 %v595
      %v926 = vunpack.c.l.b16 %v596
      %v927 = vunpack.c.h.b16 %v596
      %v928 = vunpack.c.l.b16 %v597
      %v929 = vunpack.c.h.b16 %v597
      %v930 = vunpack.c.l.b16 %v598
      %v931 = vunpack.c.h.b16 %v598
      %v932 = vunpack.c.l.b16 %v599
      %v933 = vunpack.c.h.b16 %v599
      %v934 = vunpack.c.l.b16 %v600
      %v935 = vunpack.c.h.b16 %v600
      %v936 = vunpack.c.l.b16 %v601
      %v937 = vunpack.c.h.b16 %v601
      %v938 = vunpack.c.l.b16 %v602
      %v939 = vunpack.c.h.b16 %v602
      %v940 = vunpack.c.l.b16 %v603
      %v941 = vunpack.c.h.b16 %v603
      %v942 = vunpack.c.l.b16 %v604
      %v943 = vunpack.c.h.b16 %v604
      %v944 = vunpack.c.l.b16 %v605
      %v945 = vunpack.c.h.b16 %v605
      %v946 = vunpack.c.l.b16 %v606
      %v947 = vunpack.c.h.b16 %v606
      %v948 = vunpack.c.l.b16 %v607
      %v949 = vunpack.c.h.b16 %v607
      %v950 = vunpack.c.l.b16 %v608
      %v951 = vunpack.c.h.b16 %v608
      %v952 = vunpack.c.l.b16 %v609
      %v953 = vunpack.c.h.b16 %v609
      %v954 = vunpack.c.l.b16 %v610
      %v955 = vunpack.c.h.b16 %v610
      %v956 = vunpack.c.l.b16 %v611
      %v957 = vunpack.c.h.b16 %v611
      %v958 = vunpack.c.l.b16 %v612
      %v959 = vunpack.c.h.b16 %v612
      %v960 = vunpack.c.l.b16 %v613
      %v961 = vunpack.c.h.b16 %v613
      %v962 = vunpack.c.l.b16 %v614
      %v963 = vunpack.c.h.b16 %v614
      %v964 = vunpack.c.l.b16 %v615
      %v965 = vunpack.c.h.b16 %v615
      %v966 = vunpack.c.l.b16 %v616
      %v967 = vunpack.c.h.b16 %v616
      %v968 = vunpack.c.l.b16 %v617
      %v969 = vunpack.c.h.b16 %v617
      %v970 = vunpack.c.l.b16 %v618
      %v971 = vunpack.c.h.b16 %v618
      %v972 = vunpack.c.l.b16 %v619
      %v973 = vunpack.c.h.b16 %v619
      %v974 = vunpack.c.l.b16 %v620
      %v975 = vunpack.c.h.b16 %v620
      %v976 = vunpack.c.l.b16 %v621
      %v977 = vunpack.c.h.b16 %v621
      %v978 = vunpack.c.l.b16 %v622
      %v979 = vunpack.c.h.b16 %v622
      %v980 = vunpack.c.l.b16 %v623
      %v981 = vunpack.c.h.b16 %v623
      %v982 = vunpack.c.l.b16 %v624
      %v983 = vunpack.c.h.b16 %v624
      %v984 = vunpack.c.l.b16 %v625
      %v985 = vunpack.c.h.b16 %v625
      %v986 = vunpack.c.l.b16 %v626
      %v987 = vunpack.c.h.b16 %v626
      %v988 = vunpack.c.l.b16 %v627
      %v989 = vunpack.c.h.b16 %v627
      %v990 = vunpack.c.l.b16 %v628
      %v991 = vunpack.c.h.b16 %v628
      %v992 = vunpack.c.l.b16 %v629
      %v993 = vunpack.c.h.b16 %v629
      %v994 = vunpack.c.l.b16 %v630
      %v995 = vunpack.c.h.b16 %v630
      %v996 = vunpack.c.l.b16 %v631
      %v997 = vunpack.c.h.b16 %v631
      %v998 = vunpack.c.l.b16 %v632
      %v999 = vunpack.c.h.b16 %v632
      %v1000 = vunpack.c.l.b16 %v633
      %v1001 = vunpack.c.h.b16 %v633
      %v1002 = vunpack.c.l.b16 %v634
      %v1003 = vunpack.c.h.b16 %v634
      %v1004 = vunpack.c.l.b16 %v635
      %v1005 = vunpack.c.h.b16 %v635
      %v1006 = vunpack.c.l.b16 %v636
      %v1007 = vunpack.c.h.b16 %v636
      %v1008 = vunpack.c.l.b16 %v637
      %v1009 = vunpack.c.h.b16 %v637
      %v1010 = vunpack.c.l.b16 %v638
      %v1011 = vunpack.c.h.b16 %v638
      %v1012 = vunpack.c.l.b16 %v639
      %v1013 = vunpack.c.h.b16 %v639
      %v1014 = vunpack.c.l.b16 %v640
      %v1015 = vunpack.c.h.b16 %v640
      %v1016 = vunpack.c.l.b16 %v641
      %v1017 = vunpack.c.h.b16 %v641
      %v1018 = vunpack.c.l.b16 %v642
      %v1019 = vunpack.c.h.b16 %v642
      %v1020 = vunpack.c.l.b16 %v643
      %v1021 = vunpack.c.h.b16 %v643
      %v1022 = vunpack.c.l.b16 %v644
      %v1023 = vunpack.c.h.b16 %v644
      %v1024 = vunpack.c.l.b16 %v645
      %v1025 = vunpack.c.h.b16 %v645
      %v1026 = vunpack.c.l.b16 %v646
      %v1027 = vunpack.c.h.b16 %v646
      %v1028 = vunpack.c.l.b16 %v647
      %v1029 = vunpack.c.h.b16 %v647
      %v1030 = vunpack.c.l.b16 %v648
      %v1031 = vunpack.c.h.b16 %v648
      %v1032 = vunpack.c.l.b16 %v649
      %v1033 = vunpack.c.h.b16 %v649
      %v1034 = vunpack.c.l.b16 %v650
      %v1035 = vunpack.c.h.b16 %v650
      %v1036 = vunpack.c.l.b16 %v651
      %v1037 = vunpack.c.h.b16 %v651
      %v1038 = vunpack.c.l.b16 %v652
      %v1039 = vunpack.c.h.b16 %v652
      %v1040 = vunpack.c.l.b16 %v653
      %v1041 = vunpack.c.h.b16 %v653
      %v1042 = vunpack.c.l.b16 %v654
      %v1043 = vunpack.c.h.b16 %v654
      %v1044 = vunpack.c.l.b16 %v655
      %v1045 = vunpack.c.h.b16 %v655
      %v1046 = vunpack.c.l.b16 %v656
      %v1047 = vunpack.c.h.b16 %v656
      %v1048 = vunpack.c.l.b16 %v657
      %v1049 = vunpack.c.h.b16 %v657
      %v1050 = vunpack.c.l.b16 %v658
      %v1051 = vunpack.c.h.b16 %v658
      %v1052 = vunpack.c.l.b16 %v659
      %v1053 = vunpack.c.h.b16 %v659
      %v1054 = vunpack.c.l.b16 %v660
      %v1055 = vunpack.c.h.b16 %v660
      %v1056 = vunpack.c.l.b16 %v661
      %v1057 = vunpack.c.h.b16 %v661
      %v1058 = vunpack.c.l.b16 %v662
      %v1059 = vunpack.c.h.b16 %v662
      %v1060 = vunpack.c.l.b16 %v663
      %v1061 = vunpack.c.h.b16 %v663
      %v1062 = vunpack.c.l.b16 %v664
      %v1063 = vunpack.c.h.b16 %v664
      %v1064 = vunpack.c.l.b16 %v665
      %v1065 = vunpack.c.h.b16 %v665
      %v1066 = vunpack.c.l.b16 %v666
      %v1067 = vunpack.c.h.b16 %v666
      %v1068 = vunpack.c.l.b16 %v667
      %v1069 = vunpack.c.h.b16 %v667
      %v1070 = vunpack.c.l.b16 %v668
      %v1071 = vunpack.c.h.b16 %v668
      %v1072 = vunpack.c.l.b16 %v669
      %v1073 = vunpack.c.h.b16 %v669
      %v1074 = vunpack.c.l.b16 %v670
      %v1075 = vunpack.c.h.b16 %v670
      %v1076 = vunpack.c.l.b16 %v671
      %v1077 = vunpack.c.h.b16 %v671
      %v1078 = vunpack.c.l.b16 %v672
      %v1079 = vunpack.c.h.b16 %v672
      %v1080 = vunpack.c.l.b16 %v673
      %v1081 = vunpack.c.h.b16 %v673
      %v1082 = vunpack.c.l.b16 %v674
      %v1083 = vunpack.c.h.b16 %v674
      %v1084 = vunpack.c.l.b16 %v675
      %v1085 = vunpack.c.h.b16 %v675
      %v1086 = vunpack.c.l.b16 %v676
      %v1087 = vunpack.c.h.b16 %v676
      %v1088 = vunpack.c.l.b16 %v677
      %v1089 = vunpack.c.h.b16 %v677
      %v1090 = vunpack.c.l.b16 %v678
      %v1091 = vunpack.c.h.b16 %v678
      %v1092 = vunpack.c.l.b16 %v679
      %v1093 = vunpack.c.h.b16 %v679
      %v1094 = vunpack.c.l.b16 %v680
      %v1095 = vunpack.c.h.b16 %v680
      %v1096 = vunpack.c.l.b16 %v681
      %v1097 = vunpack.c.h.b16 %v681
      %v1098 = vunpack.c.l.b16 %v682
      %v1099 = vunpack.c.h.b16 %v682
      %v1100 = vunpack.c.l.b16 %v683
      %v1101 = vunpack.c.h.b16 %v683
      %v1102 = vunpack.c.l.b16 %v684
      %v1103 = vunpack.c.h.b16 %v684
      %v1104 = vunpack.c.l.b16 %v685
      %v1105 = vunpack.c.h.b16 %v685
      %v1106 = vunpack.c.l.b16 %v686
      %v1107 = vunpack.c.h.b16 %v686
      %v1108 = vunpack.c.l.b16 %v687
      %v1109 = vunpack.c.h.b16 %v687
      %v1110 = vunpack.c.l.b16 %v688
      %v1111 = vunpack.c.h.b16 %v688
      %v1112 = vunpack.c.l.b16 %v689
      %v1113 = vunpack.c.h.b16 %v689
      %v1114 = vunpack.c.l.b16 %v690
      %v1115 = vunpack.c.h.b16 %v690
      %v1116 = vunpack.c.l.b16 %v691
      %v1117 = vunpack.c.h.b16 %v691
      %v1118 = vunpack.c.l.b16 %v692
      %v1119 = vunpack.c.h.b16 %v692
      %v1120 = vunpack.c.l.b16 %v693
      %v1121 = vunpack.c.h.b16 %v693
      %v1122 = vunpack.c.l.b16 %v694
      %v1123 = vunpack.c.h.b16 %v694
      %v1124 = vunpack.c.l.b16 %v695
      %v1125 = vunpack.c.h.b16 %v695
      %v1126 = vunpack.c.l.b16 %v696
      %v1127 = vunpack.c.h.b16 %v696
      %v1128 = vunpack.c.l.b16 %v697
      %v1129 = vunpack.c.h.b16 %v697
      %v1130 = vunpack.c.l.b16 %v698
      %v1131 = vunpack.c.h.b16 %v698
      %v1132 = vunpack.c.l.b16 %v699
      %v1133 = vunpack.c.h.b16 %v699
      %v1134 = vunpack.c.l.b16 %v700
      %v1135 = vunpack.c.h.b16 %v700
      %v1136 = vunpack.c.l.b16 %v701
      %v1137 = vunpack.c.h.b16 %v701
      %v1138 = vunpack.c.l.b16 %v702
      %v1139 = vunpack.c.h.b16 %v702
      %v1140 = vunpack.c.l.b16 %v703
      %v1141 = vunpack.c.h.b16 %v703
      %v1142 = vunpack.c.l.b16 %v704
      %v1143 = vunpack.c.h.b16 %v704
      %v1144 = vunpack.c.l.b16 %v705
      %v1145 = vunpack.c.h.b16 %v705
      %v1146 = vunpack.c.l.b16 %v706
      %v1147 = vunpack.c.h.b16 %v706
      %v1148 = vunpack.c.l.b16 %v707
      %v1149 = vunpack.c.h.b16 %v707
      %v1150 = vunpack.c.l.b16 %v708
      %v1151 = vunpack.c.h.b16 %v708
      %v1152 = vunpack.c.l.b16 %v709
      %v1153 = vunpack.c.h.b16 %v709
      %v1154 = vunpack.c.l.b16 %v710
      %v1155 = vunpack.c.h.b16 %v710
      %v1156 = vunpack.c.l.b16 %v711
      %v1157 = vunpack.c.h.b16 %v711
      %v1158 = vunpack.c.l.b16 %v712
      %v1159 = vunpack.c.h.b16 %v712
      %v1160 = vunpack.c.l.b16 %v713
      %v1161 = vunpack.c.h.b16 %v713
      %v1162 = vunpack.c.l.b16 %v714
      %v1163 = vunpack.c.h.b16 %v714
      %v1164 = vunpack.c.l.b16 %v715
      %v1165 = vunpack.c.h.b16 %v715
      %v1166 = vunpack.c.l.b16 %v716
      %v1167 = vunpack.c.h.b16 %v716
      %v1168 = vunpack.c.l.b16 %v717
      %v1169 = vunpack.c.h.b16 %v717
      %v1170 = vunpack.c.l.b16 %v718
      %v1171 = vunpack.c.h.b16 %v718
      %v1172 = vunpack.c.l.b16 %v719
      %v1173 = vunpack.c.h.b16 %v719
      %v1174 = vunpack.c.l.b16 %v720
      %v1175 = vunpack.c.h.b16 %v720
      %v1176 = vunpack.c.l.b16 %v721
      %v1177 = vunpack.c.h.b16 %v721
      %v1178 = vunpack.c.l.b16 %v722
      %v1179 = vunpack.c.h.b16 %v722
      %v1180 = vunpack.c.l.b16 %v723
      %v1181 = vunpack.c.h.b16 %v723
      %v1182 = vunpack.c.l.b16 %v724
      %v1183 = vunpack.c.h.b16 %v724
      %v1184 = vunpack.c.l.b16 %v725
      %v1185 = vunpack.c.h.b16 %v725
      %v1186 = vunpack.c.l.b16 %v726
      %v1187 = vunpack.c.h.b16 %v726
      %v1188 = vunpack.c.l.b16 %v727
      %v1189 = vunpack.c.h.b16 %v727
      %v1190 = vpack.c.b16 %v906, %v902
      %v1191 = vpack.c.b16 %v907, %v903
      %v1192 = vpack.c.b16 %v908, %v904
      %v1193 = vpack.c.b16 %v909, %v905
      %v1194 = vpack.c.b16 %v914, %v910
      %v1195 = vpack.c.b16 %v915, %v911
      %v1196 = vpack.c.b16 %v916, %v912
      %v1197 = vpack.c.b16 %v917, %v913
      %v1198 = vpack.c.b16 %v922, %v918
      %v1199 = vpack.c.b16 %v923, %v919
      %v1200 = vpack.c.b16 %v924, %v920
      %v1201 = vpack.c.b16 %v925, %v921
      %v1202 = vpack.c.b16 %v930, %v926
      %v1203 = vpack.c.b16 %v931, %v927
      %v1204 = vpack.c.b16 %v932, %v928
      %v1205 = vpack.c.b16 %v933, %v929
      %v1206 = vpack.c.b16 %v938, %v934
      %v1207 = vpack.c.b16 %v939, %v935
      %v1208 = vpack.c.b16 %v940, %v936
      %v1209 = vpack.c.b16 %v941, %v937
      %v1210 = vpack.c.b16 %v946, %v942
      %v1211 = vpack.c.b16 %v947, %v943
      %v1212 = vpack.c.b16 %v948, %v944
      %v1213 = vpack.c.b16 %v949, %v945
      %v1214 = vpack.c.b16 %v954, %v950
      %v1215 = vpack.c.b16 %v955, %v951
      %v1216 = vpack.c.b16 %v956, %v952
      %v1217 = vpack.c.b16 %v957, %v953
      %v1218 = vpack.c.b16 %v962, %v958
      %v1219 = vpack.c.b16 %v963, %v959
      %v1220 = vpack.c.b16 %v964, %v960
      %v1221 = vpack.c.b16 %v965, %v961
      %v1222 = vpack.c.b16 %v970, %v966
      %v1223 = vpack.c.b16 %v971, %v967
      %v1224 = vpack.c.b16 %v972, %v968
      %v1225 = vpack.c.b16 %v973, %v969
      %v1226 = vpack.c.b16 %v978, %v974
      %v1227 = vpack.c.b16 %v979, %v975
      %v1228 = vpack.c.b16 %v980, %v976
      %v1229 = vpack.c.b16 %v981, %v977
      %v1230 = vpack.c.b16 %v986, %v982
      %v1231 = vpack.c.b16 %v987, %v983
      %v1232 = vpack.c.b16 %v988, %v984
      %v1233 = vpack.c.b16 %v989, %v985
      %v1234 = vpack.c.b16 %v994, %v990
      %v1235 = vpack.c.b16 %v995, %v991
      %v1236 = vpack.c.b16 %v996, %v992
      %v1237 = vpack.c.b16 %v997, %v993
      %v1238 = vpack.c.b16 %v1002, %v998
      %v1239 = vpack.c.b16 %v1003, %v999
      %v1240 = vpack.c.b16 %v1004, %v1000
      %v1241 = vpack.c.b16 %v1005, %v1001
      %v1242 = vpack.c.b16 %v1010, %v1006
      %v1243 = vpack.c.b16 %v1011, %v1007
      %v1244 = vpack.c.b16 %v1012, %v1008
      %v1245 = vpack.c.b16 %v1013, %v1009
      %v1246 = vpack.c.b16 %v1018, %v1014
      %v1247 = vpack.c.b16 %v1019, %v1015
      %v1248 = vpack.c.b16 %v1020, %v1016
      %v1249 = vpack.c.b16 %v1021, %v1017
      %v1250 = vpack.c.b16 %v1026, %v1022
      %v1251 = vpack.c.b16 %v1027, %v1023
      %v1252 = vpack.c.b16 %v1028, %v1024
      %v1253 = vpack.c.b16 %v1029, %v1025
      %v1254 = vpack.c.b16 %v1034, %v1030
      %v1255 = vpack.c.b16 %v1035, %v1031
      %v1256 = vpack.c.b16 %v1036, %v1032
      %v1257 = vpack.c.b16 %v1037, %v1033
      %v1258 = vpack.c.b16 %v1042, %v1038
      %v1259 = vpack.c.b16 %v1043, %v1039
      %v1260 = vpack.c.b16 %v1044, %v1040
      %v1261 = vpack.c.b16 %v1045, %v1041
      %v1262 = vpack.c.b16 %v1050, %v1046
      %v1263 = vpack.c.b16 %v1051, %v1047
      %v1264 = vpack.c.b16 %v1052, %v1048
      %v1265 = vpack.c.b16 %v1053, %v1049
      %v1266 = vpack.c.b16 %v1058, %v1054
      %v1267 = vpack.c.b16 %v1059, %v1055
      %v1268 = vpack.c.b16 %v1060, %v1056
      %v1269 = vpack.c.b16 %v1061, %v1057
      %v1270 = vpack.c.b16 %v1066, %v1062
      %v1271 = vpack.c.b16 %v1067, %v1063
      %v1272 = vpack.c.b16 %v1068, %v1064
      %v1273 = vpack.c.b16 %v1069, %v1065
      %v1274 = vpack.c.b16 %v1074, %v1070
      %v1275 = vpack.c.b16 %v1075, %v1071
      %v1276 = vpack.c.b16 %v1076, %v1072
      %v1277 = vpack.c.b16 %v1077, %v1073
      %v1278 = vpack.c.b16 %v1082, %v1078
      %v1279 = vpack.c.b16 %v1083, %v1079
      %v1280 = vpack.c.b16 %v1084, %v1080
      %v1281 = vpack.c.b16 %v1085, %v1081
      %v1282 = vpack.c.b16 %v1090, %v1086
      %v1283 = vpack.c.b16 %v1091, %v1087
      %v1284 = vpack.c.b16 %v1092, %v1088
      %v1285 = vpack.c.b16 %v1093, %v1089
      %v1286 = vpack.c.b16 %v1098, %v1094
      %v1287 = vpack.c.b16 %v1099, %v1095
      %v1288 = vpack.c.b16 %v1100, %v1096
      %v1289 = vpack.c.b16 %v1101, %v1097
      %v1290 = vpack.c.b16 %v1106, %v1102
      %v1291 = vpack.c.b16 %v1107, %v1103
      %v1292 = vpack.c.b16 %v1108, %v1104
      %v1293 = vpack.c.b16 %v1109, %v1105
      %v1294 = vpack.c.b16 %v1114, %v1110
      %v1295 = vpack.c.b16 %v1115, %v1111
      %v1296 = vpack.c.b16 %v1116, %v1112
      %v1297 = vpack.c.b16 %v1117, %v1113
      %v1298 = vpack.c.b16 %v1122, %v1118
      %v1299 = vpack.c.b16 %v1123, %v1119
      %v1300 = vpack.c.b16 %v1124, %v1120
      %v1301 = vpack.c.b16 %v1125, %v1121
      %v1302 = vpack.c.b16 %v1130, %v1126
      %v1303 = vpack.c.b16 %v1131, %v1127
      %v1304 = vpack.c.b16 %v1132, %v1128
      %v1305 = vpack.c.b16 %v1133, %v1129
      %v1306 = vpack.c.b16 %v1138, %v1134
      %v1307 = vpack.c.b16 %v1139, %v1135
      %v1308 = vpack.c.b16 %v1140, %v1136
      %v1309 = vpack.c.b16 %v1141, %v1137
      %v1310 = vpack.c.b16 %v1146, %v1142
      %v1311 = vpack.c.b16 %v1147, %v1143
      %v1312 = vpack.c.b16 %v1148, %v1144
      %v1313 = vpack.c.b16 %v1149, %v1145
      %v1314 = vpack.c.b16 %v1154, %v1150
      %v1315 = vpack.c.b16 %v1155, %v1151
      %v1316 = vpack.c.b16 %v1156, %v1152
      %v1317 = vpack.c.b16 %v1157, %v1153
      %v1318 = vpack.c.b16 %v1162, %v1158
      %v1319 = vpack.c.b16 %v1163, %v1159
      %v1320 = vpack.c.b16 %v1164, %v1160
      %v1321 = vpack.c.b16 %v1165, %v1161
      %v1322 = vpack.c.b16 %v1170, %v1166
      %v1323 = vpack.c.b16 %v1171, %v1167
      %v1324 = vpack.c.b16 %v1172, %v1168
      %v1325 = vpack.c.b16 %v1173, %v1169
      %v1326 = vpack.c.b16 %v1178, %v1174
      %v1327 = vpack.c.b16 %v1179, %v1175
      %v1328 = vpack.c.b16 %v1180, %v1176
      %v1329 = vpack.c.b16 %v1181, %v1177
      %v1330 = vpack.c.b16 %v1186, %v1182
      %v1331 = vpack.c.b16 %v1187, %v1183
      %v1332 = vpack.c.b16 %v1188, %v1184
      %v1333 = vpack.c.b16 %v1189, %v1185
      %v1479 = vsel %vm445, %v732, 0
      %v1482 = vsel %vm445, %v736, 0
      %v1485 = vsel %vm445, %v740, 0
      %v1488 = vsel %vm445, %v744, 0
      %1490 = vmatprep.subr.bf16.mxu0 %v1191
      %1491 = vmatpush1.bf16.msra.mxu0 %v1190
      %1492 = vmatprep.subr.bf16.mxu0 %v1195
      %1493 = vmatpush1.bf16.msra.mxu0 %v1194
      %1494 = vmatprep.subr.bf16.mxu0 %v1199
      %1495 = vmatpush1.bf16.msra.mxu0 %v1198
      %1496 = vmatprep.subr.bf16.mxu0 %v1203
      %1497 = vmatpush1.bf16.msra.mxu0 %v1202
      %1498 = vmatprep.subr.bf16.mxu0 %v1207
      %1499 = vmatpush1.bf16.msra.mxu0 %v1206
      %1500 = vmatprep.subr.bf16.mxu0 %v1211
      %1501 = vmatpush1.bf16.msra.mxu0 %v1210
      %1502 = vmatprep.subr.bf16.mxu0 %v1215
      %1503 = vmatpush1.bf16.msra.mxu0 %v1214
      %1504 = vmatprep.subr.bf16.mxu0 %v1219
      %1505 = vmatpush1.bf16.msra.mxu0 %v1218
      %1506 = vmatprep.subr.bf16.mxu0 %v1223
      %1507 = vmatpush1.bf16.msra.mxu0 %v1222
      %1508 = vmatprep.subr.bf16.mxu0 %v1227
      %1509 = vmatpush1.bf16.msra.mxu0 %v1226
      %1510 = vmatprep.subr.bf16.mxu0 %v1231
      %1511 = vmatpush1.bf16.msra.mxu0 %v1230
      %1512 = vmatprep.subr.bf16.mxu0 %v1235
      %1513 = vmatpush1.bf16.msra.mxu0 %v1234
      %1514 = vmatprep.subr.bf16.mxu0 %v1239
      %1515 = vmatpush1.bf16.msra.mxu0 %v1238
      %1516 = vmatprep.subr.bf16.mxu0 %v1243
      %1517 = vmatpush1.bf16.msra.mxu0 %v1242
      %1518 = vmatprep.subr.bf16.mxu0 %v1247
      %1519 = vmatpush1.bf16.msra.mxu0 %v1246
      %1520 = vmatprep.subr.bf16.mxu0 %v1251
      %1521 = vmatpush1.bf16.msra.mxu0 %v1250
      %1522 = vmatprep.mubr.bf16.mxu0 %v729
      %1523 = vmatmul.mubr.bf16.gmra.mrb[0].mxu0 %v728
      %v1524 = vpop.f32.mrb[0].mxu0
      %v1525 = vadd.f32 0.0, %v1524
      %v1526 = vpop.f32.mrb[0].mxu0
      %v1527 = vadd.f32 0.0, %v1526
      %v1528 = vpop.f32.mrb[0].mxu0
      %v1529 = vadd.f32 0.0, %v1528
      %v1530 = vpop.f32.mrb[0].mxu0
      %v1531 = vadd.f32 0.0, %v1530
      %1532 = vmatprep.mubr.bf16.mxu0 %v733
      %1533 = vmatmul.mubr.bf16.gmra.mrb[0].mxu0 %v731
      %v1534 = vpop.f32.mrb[0].mxu0
      %v1535 = vadd.f32 0.0, %v1534
      %v1536 = vpop.f32.mrb[0].mxu0
      %v1537 = vadd.f32 0.0, %v1536
      %v1538 = vpop.f32.mrb[0].mxu0
      %v1539 = vadd.f32 0.0, %v1538
      %v1540 = vpop.f32.mrb[0].mxu0
      %v1541 = vadd.f32 0.0, %v1540
      %1542 = vmatprep.mubr.bf16.mxu0 %v737
      %1543 = vmatmul.mubr.bf16.gmra.mrb[0].mxu0 %v735
      %v1544 = vpop.f32.mrb[0].mxu0
      %v1545 = vadd.f32 0.0, %v1544
      %v1546 = vpop.f32.mrb[0].mxu0
      %v1547 = vadd.f32 0.0, %v1546
      %v1548 = vpop.f32.mrb[0].mxu0
      %v1549 = vadd.f32 0.0, %v1548
      %v1550 = vpop.f32.mrb[0].mxu0
      %v1551 = vadd.f32 0.0, %v1550
      %1552 = vmatprep.mubr.bf16.mxu0 %v741
      %1553 = vmatmul.mubr.bf16.gmra.mrb[0].mxu0 %v739
      %v1554 = vpop.f32.mrb[0].mxu0
      %v1555 = vadd.f32 0.0, %v1554
      %v1556 = vpop.f32.mrb[0].mxu0
      %v1557 = vadd.f32 0.0, %v1556
      %v1558 = vpop.f32.mrb[0].mxu0
      %v1559 = vadd.f32 0.0, %v1558
      %v1560 = vpop.f32.mrb[0].mxu0
      %v1561 = vadd.f32 0.0, %v1560
      %1562 = vdwg.mxu0
      %1563 = vmatprep.subr.bf16.mxu0 %v1255
      %1564 = vmatpush1.bf16.msra.mxu0 %v1254
      %1565 = vmatprep.subr.bf16.mxu0 %v1259
      %1566 = vmatpush1.bf16.msra.mxu0 %v1258
      %1567 = vmatprep.subr.bf16.mxu0 %v1263
      %1568 = vmatpush1.bf16.msra.mxu0 %v1262
      %1569 = vmatprep.subr.bf16.mxu0 %v1267
      %1570 = vmatpush1.bf16.msra.mxu0 %v1266
      %1571 = vmatprep.subr.bf16.mxu0 %v1271
      %1572 = vmatpush1.bf16.msra.mxu0 %v1270
      %1573 = vmatprep.subr.bf16.mxu0 %v1275
      %1574 = vmatpush1.bf16.msra.mxu0 %v1274
      %1575 = vmatprep.subr.bf16.mxu0 %v1279
      %1576 = vmatpush1.bf16.msra.mxu0 %v1278
      %1577 = vmatprep.subr.bf16.mxu0 %v1283
      %1578 = vmatpush1.bf16.msra.mxu0 %v1282
      %1579 = vmatprep.subr.bf16.mxu0 %v1287
      %1580 = vmatpush1.bf16.msra.mxu0 %v1286
      %1581 = vmatprep.subr.bf16.mxu0 %v1291
      %1582 = vmatpush1.bf16.msra.mxu0 %v1290
      %1583 = vmatprep.subr.bf16.mxu0 %v1295
      %1584 = vmatpush1.bf16.msra.mxu0 %v1294
      %1585 = vmatprep.subr.bf16.mxu0 %v1299
      %1586 = vmatpush1.bf16.msra.mxu0 %v1298
      %1587 = vmatprep.subr.bf16.mxu0 %v1303
      %1588 = vmatpush1.bf16.msra.mxu0 %v1302
      %1589 = vmatprep.subr.bf16.mxu0 %v1307
      %1590 = vmatpush1.bf16.msra.mxu0 %v1306
      %1591 = vmatprep.subr.bf16.mxu0 %v1311
      %1592 = vmatpush1.bf16.msra.mxu0 %v1310
      %1593 = vmatprep.subr.bf16.mxu0 %v1315
      %1594 = vmatpush1.bf16.msra.mxu0 %v1314
      %1595 = vmatprep.mubr.bf16.mxu0 %v731
      %1596 = vmatmul.mubr.bf16.gmra.mrb[0].mxu0 %v730
      %v1597 = vpop.f32.mrb[0].mxu0
      %v1598 = vadd.f32 %v1525, %v1597
      %v1599 = vpop.f32.mrb[0].mxu0
      %v1600 = vadd.f32 %v1527, %v1599
      %v1601 = vpop.f32.mrb[0].mxu0
      %v1602 = vadd.f32 %v1529, %v1601
      %v1603 = vpop.f32.mrb[0].mxu0
      %v1604 = vadd.f32 %v1531, %v1603
      %1605 = vmatprep.mubr.bf16.mxu0 %v735
      %1606 = vmatmul.mubr.bf16.gmra.mrb[0].mxu0 %v734
      %v1607 = vpop.f32.mrb[0].mxu0
      %v1608 = vadd.f32 %v1535, %v1607
      %v1609 = vpop.f32.mrb[0].mxu0
      %v1610 = vadd.f32 %v1537, %v1609
      %v1611 = vpop.f32.mrb[0].mxu0
      %v1612 = vadd.f32 %v1539, %v1611
      %v1613 = vpop.f32.mrb[0].mxu0
      %v1614 = vadd.f32 %v1541, %v1613
      %1615 = vmatprep.mubr.bf16.mxu0 %v739
      %1616 = vmatmul.mubr.bf16.gmra.mrb[0].mxu0 %v738
      %v1617 = vpop.f32.mrb[0].mxu0
      %v1618 = vadd.f32 %v1545, %v1617
      %v1619 = vpop.f32.mrb[0].mxu0
      %v1620 = vadd.f32 %v1547, %v1619
      %v1621 = vpop.f32.mrb[0].mxu0
      %v1622 = vadd.f32 %v1549, %v1621
      %v1623 = vpop.f32.mrb[0].mxu0
      %v1624 = vadd.f32 %v1551, %v1623
      %1625 = vmatprep.mubr.bf16.mxu0 %v743
      %1626 = vmatmul.mubr.bf16.gmra.mrb[0].mxu0 %v742
      %v1627 = vpop.f32.mrb[0].mxu0
      %v1628 = vadd.f32 %v1555, %v1627
      %v1629 = vpop.f32.mrb[0].mxu0
      %v1630 = vadd.f32 %v1557, %v1629
      %v1631 = vpop.f32.mrb[0].mxu0
      %v1632 = vadd.f32 %v1559, %v1631
      %v1633 = vpop.f32.mrb[0].mxu0
      %v1634 = vadd.f32 %v1561, %v1633
      %1635 = vdwg.mxu0
      %1636 = vmatprep.subr.bf16.mxu0 %v1319
      %1637 = vmatpush1.bf16.msra.mxu0 %v1318
      %1638 = vmatprep.subr.bf16.mxu0 %v1323
      %1639 = vmatpush1.bf16.msra.mxu0 %v1322
      %1640 = vmatprep.subr.bf16.mxu0 %v1327
      %1641 = vmatpush1.bf16.msra.mxu0 %v1326
      %1642 = vmatprep.subr.bf16.mxu0 %v1331
      %1643 = vmatpush1.bf16.msra.mxu0 %v1330
      %1644 = vmatprep.subr.bf16.mxu0 0
      %1645 = vmatpush1.bf16.msra.mxu0 0
      %1646 = vmatprep.subr.bf16.mxu0 0
      %1647 = vmatpush1.bf16.msra.mxu0 0
      %1648 = vmatprep.subr.bf16.mxu0 0
      %1649 = vmatpush1.bf16.msra.mxu0 0
      %1650 = vmatprep.subr.bf16.mxu0 0
      %1651 = vmatpush1.bf16.msra.mxu0 0
      %1652 = vmatprep.subr.bf16.mxu0 0
      %1653 = vmatpush1.bf16.msra.mxu0 0
      %1654 = vmatprep.subr.bf16.mxu0 0
      %1655 = vmatpush1.bf16.msra.mxu0 0
      %1656 = vmatprep.subr.bf16.mxu0 0
      %1657 = vmatpush1.bf16.msra.mxu0 0
      %1658 = vmatprep.subr.bf16.mxu0 0
      %1659 = vmatpush1.bf16.msra.mxu0 0
      %1660 = vmatprep.subr.bf16.mxu0 0
      %1661 = vmatpush1.bf16.msra.mxu0 0
      %1662 = vmatprep.subr.bf16.mxu0 0
      %1663 = vmatpush1.bf16.msra.mxu0 0
      %1664 = vmatprep.subr.bf16.mxu0 0
      %1665 = vmatpush1.bf16.msra.mxu0 0
      %1666 = vmatprep.subr.bf16.mxu0 0
      %1667 = vmatpush1.bf16.msra.mxu0 0
      %1668 = vmatprep.mubr.bf16.mxu0 0
      %1669 = vmatmul.mubr.bf16.gmra.mrb[0].mxu0 %v1479
      %v1670 = vpop.f32.mrb[0].mxu0
      %v1671 = vadd.f32 %v1598, %v1670
      %v1672 = vpop.f32.mrb[0].mxu0
      %v1673 = vadd.f32 %v1600, %v1672
      %v1674 = vpop.f32.mrb[0].mxu0
      %v1675 = vadd.f32 %v1602, %v1674
      %v1676 = vpop.f32.mrb[0].mxu0
      %v1677 = vadd.f32 %v1604, %v1676
      %1678 = vmatprep.mubr.bf16.mxu0 0
      %1679 = vmatmul.mubr.bf16.gmra.mrb[0].mxu0 %v1482
      %v1680 = vpop.f32.mrb[0].mxu0
      %v1681 = vadd.f32 %v1608, %v1680
      %v1682 = vpop.f32.mrb[0].mxu0
      %v1683 = vadd.f32 %v1610, %v1682
      %v1684 = vpop.f32.mrb[0].mxu0
      %v1685 = vadd.f32 %v1612, %v1684
      %v1686 = vpop.f32.mrb[0].mxu0
      %v1687 = vadd.f32 %v1614, %v1686
      %1688 = vmatprep.mubr.bf16.mxu0 0
      %1689 = vmatmul.mubr.bf16.gmra.mrb[0].mxu0 %v1485
      %v1690 = vpop.f32.mrb[0].mxu0
      %v1691 = vadd.f32 %v1618, %v1690
      %v1692 = vpop.f32.mrb[0].mxu0
      %v1693 = vadd.f32 %v1620, %v1692
      %v1694 = vpop.f32.mrb[0].mxu0
      %v1695 = vadd.f32 %v1622, %v1694
      %v1696 = vpop.f32.mrb[0].mxu0
      %v1697 = vadd.f32 %v1624, %v1696
      %1698 = vmatprep.mubr.bf16.mxu0 0
      %1699 = vmatmul.mubr.bf16.gmra.mrb[0].mxu0 %v1488
      %v1700 = vpop.f32.mrb[0].mxu0
      %v1701 = vadd.f32 %v1628, %v1700
      %v1702 = vpop.f32.mrb[0].mxu0
      %v1703 = vadd.f32 %v1630, %v1702
      %v1704 = vpop.f32.mrb[0].mxu0
      %v1705 = vadd.f32 %v1632, %v1704
      %v1706 = vpop.f32.mrb[0].mxu0
      %v1707 = vadd.f32 %v1634, %v1706
      %1708 = vdwg.mxu0
      %1709 = vmatprep.subr.bf16.mxu0 %v1193
      %1710 = vmatpush1.bf16.msra.mxu0 %v1192
      %1711 = vmatprep.subr.bf16.mxu0 %v1197
      %1712 = vmatpush1.bf16.msra.mxu0 %v1196
      %1713 = vmatprep.subr.bf16.mxu0 %v1201
      %1714 = vmatpush1.bf16.msra.mxu0 %v1200
      %1715 = vmatprep.subr.bf16.mxu0 %v1205
      %1716 = vmatpush1.bf16.msra.mxu0 %v1204
      %1717 = vmatprep.subr.bf16.mxu0 %v1209
      %1718 = vmatpush1.bf16.msra.mxu0 %v1208
      %1719 = vmatprep.subr.bf16.mxu0 %v1213
      %1720 = vmatpush1.bf16.msra.mxu0 %v1212
      %1721 = vmatprep.subr.bf16.mxu0 %v1217
      %1722 = vmatpush1.bf16.msra.mxu0 %v1216
      %1723 = vmatprep.subr.bf16.mxu0 %v1221
      %1724 = vmatpush1.bf16.msra.mxu0 %v1220
      %1725 = vmatprep.subr.bf16.mxu0 %v1225
      %1726 = vmatpush1.bf16.msra.mxu0 %v1224
      %1727 = vmatprep.subr.bf16.mxu0 %v1229
      %1728 = vmatpush1.bf16.msra.mxu0 %v1228
      %1729 = vmatprep.subr.bf16.mxu0 %v1233
      %1730 = vmatpush1.bf16.msra.mxu0 %v1232
      %1731 = vmatprep.subr.bf16.mxu0 %v1237
      %1732 = vmatpush1.bf16.msra.mxu0 %v1236
      %1733 = vmatprep.subr.bf16.mxu0 %v1241
      %1734 = vmatpush1.bf16.msra.mxu0 %v1240
      %1735 = vmatprep.subr.bf16.mxu0 %v1245
      %1736 = vmatpush1.bf16.msra.mxu0 %v1244
      %1737 = vmatprep.subr.bf16.mxu0 %v1249
      %1738 = vmatpush1.bf16.msra.mxu0 %v1248
      %1739 = vmatprep.subr.bf16.mxu0 %v1253
      %1740 = vmatpush1.bf16.msra.mxu0 %v1252
      %1741 = vmatprep.mubr.bf16.mxu0 %v729
      %1742 = vmatmul.mubr.bf16.gmra.mrb[0].mxu0 %v728
      %v1743 = vpop.f32.mrb[0].mxu0
      %v1744 = vadd.f32 0.0, %v1743
      %v1745 = vpop.f32.mrb[0].mxu0
      %v1746 = vadd.f32 0.0, %v1745
      %v1747 = vpop.f32.mrb[0].mxu0
      %v1748 = vadd.f32 0.0, %v1747
      %v1749 = vpop.f32.mrb[0].mxu0
      %v1750 = vadd.f32 0.0, %v1749
      %1751 = vmatprep.mubr.bf16.mxu0 %v733
      %1752 = vmatmul.mubr.bf16.gmra.mrb[0].mxu0 %v731
      %v1753 = vpop.f32.mrb[0].mxu0
      %v1754 = vadd.f32 0.0, %v1753
      %v1755 = vpop.f32.mrb[0].mxu0
      %v1756 = vadd.f32 0.0, %v1755
      %v1757 = vpop.f32.mrb[0].mxu0
      %v1758 = vadd.f32 0.0, %v1757
      %v1759 = vpop.f32.mrb[0].mxu0
      %v1760 = vadd.f32 0.0, %v1759
      %1761 = vmatprep.mubr.bf16.mxu0 %v737
      %1762 = vmatmul.mubr.bf16.gmra.mrb[0].mxu0 %v735
      %v1763 = vpop.f32.mrb[0].mxu0
      %v1764 = vadd.f32 0.0, %v1763
      %v1765 = vpop.f32.mrb[0].mxu0
      %v1766 = vadd.f32 0.0, %v1765
      %v1767 = vpop.f32.mrb[0].mxu0
      %v1768 = vadd.f32 0.0, %v1767
      %v1769 = vpop.f32.mrb[0].mxu0
      %v1770 = vadd.f32 0.0, %v1769
      %1771 = vmatprep.mubr.bf16.mxu0 %v741
      %1772 = vmatmul.mubr.bf16.gmra.mrb[0].mxu0 %v739
      %v1773 = vpop.f32.mrb[0].mxu0
      %v1774 = vadd.f32 0.0, %v1773
      %v1775 = vpop.f32.mrb[0].mxu0
      %v1776 = vadd.f32 0.0, %v1775
      %v1777 = vpop.f32.mrb[0].mxu0
      %v1778 = vadd.f32 0.0, %v1777
      %v1779 = vpop.f32.mrb[0].mxu0
      %v1780 = vadd.f32 0.0, %v1779
      %1781 = vdwg.mxu0
      %1782 = vmatprep.subr.bf16.mxu0 %v1257
      %1783 = vmatpush1.bf16.msra.mxu0 %v1256
      %1784 = vmatprep.subr.bf16.mxu0 %v1261
      %1785 = vmatpush1.bf16.msra.mxu0 %v1260
      %1786 = vmatprep.subr.bf16.mxu0 %v1265
      %1787 = vmatpush1.bf16.msra.mxu0 %v1264
      %1788 = vmatprep.subr.bf16.mxu0 %v1269
      %1789 = vmatpush1.bf16.msra.mxu0 %v1268
      %1790 = vmatprep.subr.bf16.mxu0 %v1273
      %1791 = vmatpush1.bf16.msra.mxu0 %v1272
      %1792 = vmatprep.subr.bf16.mxu0 %v1277
      %1793 = vmatpush1.bf16.msra.mxu0 %v1276
      %1794 = vmatprep.subr.bf16.mxu0 %v1281
      %1795 = vmatpush1.bf16.msra.mxu0 %v1280
      %1796 = vmatprep.subr.bf16.mxu0 %v1285
      %1797 = vmatpush1.bf16.msra.mxu0 %v1284
      %1798 = vmatprep.subr.bf16.mxu0 %v1289
      %1799 = vmatpush1.bf16.msra.mxu0 %v1288
      %1800 = vmatprep.subr.bf16.mxu0 %v1293
      %1801 = vmatpush1.bf16.msra.mxu0 %v1292
      %1802 = vmatprep.subr.bf16.mxu0 %v1297
      %1803 = vmatpush1.bf16.msra.mxu0 %v1296
      %1804 = vmatprep.subr.bf16.mxu0 %v1301
      %1805 = vmatpush1.bf16.msra.mxu0 %v1300
      %1806 = vmatprep.subr.bf16.mxu0 %v1305
      %1807 = vmatpush1.bf16.msra.mxu0 %v1304
      %1808 = vmatprep.subr.bf16.mxu0 %v1309
      %1809 = vmatpush1.bf16.msra.mxu0 %v1308
      %1810 = vmatprep.subr.bf16.mxu0 %v1313
      %1811 = vmatpush1.bf16.msra.mxu0 %v1312
      %1812 = vmatprep.subr.bf16.mxu0 %v1317
      %1813 = vmatpush1.bf16.msra.mxu0 %v1316
      %1814 = vmatprep.mubr.bf16.mxu0 %v731
      %1815 = vmatmul.mubr.bf16.gmra.mrb[0].mxu0 %v730
      %v1816 = vpop.f32.mrb[0].mxu0
      %v1817 = vadd.f32 %v1744, %v1816
      %v1818 = vpop.f32.mrb[0].mxu0
      %v1819 = vadd.f32 %v1746, %v1818
      %v1820 = vpop.f32.mrb[0].mxu0
      %v1821 = vadd.f32 %v1748, %v1820
      %v1822 = vpop.f32.mrb[0].mxu0
      %v1823 = vadd.f32 %v1750, %v1822
      %1824 = vmatprep.mubr.bf16.mxu0 %v735
      %1825 = vmatmul.mubr.bf16.gmra.mrb[0].mxu0 %v734
      %v1826 = vpop.f32.mrb[0].mxu0
      %v1827 = vadd.f32 %v1754, %v1826
      %v1828 = vpop.f32.mrb[0].mxu0
      %v1829 = vadd.f32 %v1756, %v1828
      %v1830 = vpop.f32.mrb[0].mxu0
      %v1831 = vadd.f32 %v1758, %v1830
      %v1832 = vpop.f32.mrb[0].mxu0
      %v1833 = vadd.f32 %v1760, %v1832
      %1834 = vmatprep.mubr.bf16.mxu0 %v739
      %1835 = vmatmul.mubr.bf16.gmra.mrb[0].mxu0 %v738
      %v1836 = vpop.f32.mrb[0].mxu0
      %v1837 = vadd.f32 %v1764, %v1836
      %v1838 = vpop.f32.mrb[0].mxu0
      %v1839 = vadd.f32 %v1766, %v1838
      %v1840 = vpop.f32.mrb[0].mxu0
      %v1841 = vadd.f32 %v1768, %v1840
      %v1842 = vpop.f32.mrb[0].mxu0
      %v1843 = vadd.f32 %v1770, %v1842
      %1844 = vmatprep.mubr.bf16.mxu0 %v743
      %1845 = vmatmul.mubr.bf16.gmra.mrb[0].mxu0 %v742
      %v1846 = vpop.f32.mrb[0].mxu0
      %v1847 = vadd.f32 %v1774, %v1846
      %v1848 = vpop.f32.mrb[0].mxu0
      %v1849 = vadd.f32 %v1776, %v1848
      %v1850 = vpop.f32.mrb[0].mxu0
      %v1851 = vadd.f32 %v1778, %v1850
      %v1852 = vpop.f32.mrb[0].mxu0
      %v1853 = vadd.f32 %v1780, %v1852
      %1854 = vdwg.mxu0
      %1855 = vmatprep.subr.bf16.mxu0 %v1321
      %1856 = vmatpush1.bf16.msra.mxu0 %v1320
      %1857 = vmatprep.subr.bf16.mxu0 %v1325
      %1858 = vmatpush1.bf16.msra.mxu0 %v1324
      %1859 = vmatprep.subr.bf16.mxu0 %v1329
      %1860 = vmatpush1.bf16.msra.mxu0 %v1328
      %1861 = vmatprep.subr.bf16.mxu0 %v1333
      %1862 = vmatpush1.bf16.msra.mxu0 %v1332
      %1863 = vmatprep.subr.bf16.mxu0 0
      %1864 = vmatpush1.bf16.msra.mxu0 0
      %1865 = vmatprep.subr.bf16.mxu0 0
      %1866 = vmatpush1.bf16.msra.mxu0 0
      %1867 = vmatprep.subr.bf16.mxu0 0
      %1868 = vmatpush1.bf16.msra.mxu0 0
      %1869 = vmatprep.subr.bf16.mxu0 0
      %1870 = vmatpush1.bf16.msra.mxu0 0
      %1871 = vmatprep.subr.bf16.mxu0 0
      %1872 = vmatpush1.bf16.msra.mxu0 0
      %1873 = vmatprep.subr.bf16.mxu0 0
      %1874 = vmatpush1.bf16.msra.mxu0 0
      %1875 = vmatprep.subr.bf16.mxu0 0
      %1876 = vmatpush1.bf16.msra.mxu0 0
      %1877 = vmatprep.subr.bf16.mxu0 0
      %1878 = vmatpush1.bf16.msra.mxu0 0
      %1879 = vmatprep.subr.bf16.mxu0 0
      %1880 = vmatpush1.bf16.msra.mxu0 0
      %1881 = vmatprep.subr.bf16.mxu0 0
      %1882 = vmatpush1.bf16.msra.mxu0 0
      %1883 = vmatprep.subr.bf16.mxu0 0
      %1884 = vmatpush1.bf16.msra.mxu0 0
      %1885 = vmatprep.subr.bf16.mxu0 0
      %1886 = vmatpush1.bf16.msra.mxu0 0
      %1887 = vmatprep.mubr.bf16.mxu0 0
      %1888 = vmatmul.mubr.bf16.gmra.mrb[0].mxu0 %v1479
      %v1889 = vpop.f32.mrb[0].mxu0
      %v1890 = vadd.f32 %v1817, %v1889
      %v1891 = vpop.f32.mrb[0].mxu0
      %v1892 = vadd.f32 %v1819, %v1891
      %v1893 = vpop.f32.mrb[0].mxu0
      %v1894 = vadd.f32 %v1821, %v1893
      %v1895 = vpop.f32.mrb[0].mxu0
      %v1896 = vadd.f32 %v1823, %v1895
      %1897 = vmatprep.mubr.bf16.mxu0 0
      %1898 = vmatmul.mubr.bf16.gmra.mrb[0].mxu0 %v1482
      %v1899 = vpop.f32.mrb[0].mxu0
      %v1900 = vadd.f32 %v1827, %v1899
      %v1901 = vpop.f32.mrb[0].mxu0
      %v1902 = vadd.f32 %v1829, %v1901
      %v1903 = vpop.f32.mrb[0].mxu0
      %v1904 = vadd.f32 %v1831, %v1903
      %v1905 = vpop.f32.mrb[0].mxu0
      %v1906 = vadd.f32 %v1833, %v1905
      %1907 = vmatprep.mubr.bf16.mxu0 0
      %1908 = vmatmul.mubr.bf16.gmra.mrb[0].mxu0 %v1485
      %v1909 = vpop.f32.mrb[0].mxu0
      %v1910 = vadd.f32 %v1837, %v1909
      %v1911 = vpop.f32.mrb[0].mxu0
      %v1912 = vadd.f32 %v1839, %v1911
      %v1913 = vpop.f32.mrb[0].mxu0
      %v1914 = vadd.f32 %v1841, %v1913
      %v1915 = vpop.f32.mrb[0].mxu0
      %v1916 = vadd.f32 %v1843, %v1915
      %1917 = vmatprep.mubr.bf16.mxu0 0
      %1918 = vmatmul.mubr.bf16.gmra.mrb[0].mxu0 %v1488
      %v1919 = vpop.f32.mrb[0].mxu0
      %v1920 = vadd.f32 %v1847, %v1919
      %v1921 = vpop.f32.mrb[0].mxu0
      %v1922 = vadd.f32 %v1849, %v1921
      %v1923 = vpop.f32.mrb[0].mxu0
      %v1924 = vadd.f32 %v1851, %v1923
      %v1925 = vpop.f32.mrb[0].mxu0
      %v1926 = vadd.f32 %v1853, %v1925
      %1927 = vdwg.mxu0
      %v1928 = vmax.f32 %v1671, 0.0
      %v1929 = vmax.f32 %v1673, 0.0
      %v1930 = vmax.f32 %v1890, 0.0
      %v1931 = vmax.f32 %v1892, 0.0
      %v1932 = vmax.f32 %v1675, 0.0
      %v1933 = vmax.f32 %v1677, 0.0
      %v1934 = vmax.f32 %v1894, 0.0
      %v1935 = vmax.f32 %v1896, 0.0
      %v1936 = vmax.f32 %v1681, 0.0
      %v1937 = vmax.f32 %v1683, 0.0
      %v1938 = vmax.f32 %v1900, 0.0
      %v1939 = vmax.f32 %v1902, 0.0
      %v1940 = vmax.f32 %v1685, 0.0
      %v1941 = vmax.f32 %v1687, 0.0
      %v1942 = vmax.f32 %v1904, 0.0
      %v1943 = vmax.f32 %v1906, 0.0
      %v1944 = vmax.f32 %v1691, 0.0
      %v1945 = vmax.f32 %v1693, 0.0
      %v1946 = vmax.f32 %v1910, 0.0
      %v1947 = vmax.f32 %v1912, 0.0
      %v1948 = vmax.f32 %v1695, 0.0
      %v1949 = vmax.f32 %v1697, 0.0
      %v1950 = vmax.f32 %v1914, 0.0
      %v1951 = vmax.f32 %v1916, 0.0
      %v1952 = vmax.f32 %v1701, 0.0
      %v1953 = vmax.f32 %v1703, 0.0
      %v1954 = vmax.f32 %v1920, 0.0
      %v1955 = vmax.f32 %v1922, 0.0
      %v1956 = vmax.f32 %v1705, 0.0
      %v1957 = vmax.f32 %v1707, 0.0
      %v1958 = vmax.f32 %v1924, 0.0
      %v1959 = vmax.f32 %v1926, 0.0
      %v1960 = vpack.c.bf16 %v1932, %v1928
      %v1961 = vpack.c.bf16 %v1933, %v1929
      %v1962 = vpack.c.bf16 %v1934, %v1930
      %v1963 = vpack.c.bf16 %v1935, %v1931
      %v1964 = vpack.c.bf16 %v1940, %v1936
      %v1965 = vpack.c.bf16 %v1941, %v1937
      %v1966 = vpack.c.bf16 %v1942, %v1938
      %v1967 = vpack.c.bf16 %v1943, %v1939
      %v1968 = vpack.c.bf16 %v1948, %v1944
      %v1969 = vpack.c.bf16 %v1949, %v1945
      %v1970 = vpack.c.bf16 %v1950, %v1946
      %v1971 = vpack.c.bf16 %v1951, %v1947
      %v1972 = vpack.c.bf16 %v1956, %v1952
      %v1973 = vpack.c.bf16 %v1957, %v1953
      %v1974 = vpack.c.bf16 %v1958, %v1954
      %v1975 = vpack.c.bf16 %v1959, %v1955
      %v1976 = vld [vmem:[%s2] sm:$0xf]
      %v1977 = vld [vmem:[%s2 + $0x4] sm:$0xf]
      %v1978 = vld [vmem:[%s2 + $0x8] sm:$0xf]
      %v1979 = vld [vmem:[%s2 + $0xc] sm:$0xf]
      %v1980 = vld [vmem:[%s2 + $0x10] sm:$0xf]
      %v1981 = vld [vmem:[%s2 + $0x14] sm:$0xf]
      %v1982 = vld [vmem:[%s2 + $0x18] sm:$0xf]
      %v1983 = vld [vmem:[%s2 + $0x1c] sm:$0xf]
      %v1984 = vld [vmem:[%s2 + $0x20] sm:$0xf]
      %v1985 = vld [vmem:[%s2 + $0x24] sm:$0xf]
      %v1986 = vld [vmem:[%s2 + $0x28] sm:$0xf]
      %v1987 = vld [vmem:[%s2 + $0x2c] sm:$0xf]
      %v1988 = vld [vmem:[%s2 + $0x30] sm:$0xf]
      %v1989 = vld [vmem:[%s2 + $0x34] sm:$0xf]
      %v1990 = vld [vmem:[%s2 + $0x38] sm:$0xf]
      %v1991 = vld [vmem:[%s2 + $0x3c] sm:$0xf]
      %v1992 = vld [vmem:[%s2 + $0x40] sm:$0xf]
      %v1993 = vld [vmem:[%s2 + $0x44] sm:$0xf]
      %v1994 = vld [vmem:[%s2 + $0x48] sm:$0xf]
      %v1995 = vld [vmem:[%s2 + $0x4c] sm:$0xf]
      %v1996 = vld [vmem:[%s2 + $0x50] sm:$0xf]
      %v1997 = vld [vmem:[%s2 + $0x54] sm:$0xf]
      %v1998 = vld [vmem:[%s2 + $0x58] sm:$0xf]
      %v1999 = vld [vmem:[%s2 + $0x5c] sm:$0xf]
      %v2000 = vld [vmem:[%s2 + $0x60] sm:$0xf]
      %v2001 = vld [vmem:[%s2 + $0x64] sm:$0xf]
      %v2002 = vld [vmem:[%s2 + $0x68] sm:$0xf]
      %v2003 = vld [vmem:[%s2 + $0x6c] sm:$0xf]
      %v2004 = vld [vmem:[%s2 + $0x70] sm:$0xf]
      %v2005 = vld [vmem:[%s2 + $0x74] sm:$0xf]
      %v2006 = vld [vmem:[%s2 + $0x78] sm:$0xf]
      %v2007 = vld [vmem:[%s2 + $0x7c] sm:$0xf]
      %v2008 = vld [vmem:[%s2 + $0x80] sm:$0xf]
      %v2009 = vld [vmem:[%s2 + $0x84] sm:$0xf]
      %v2010 = vld [vmem:[%s2 + $0x88] sm:$0xf]
      %v2011 = vld [vmem:[%s2 + $0x8c] sm:$0xf]
      %v2012 = vld [vmem:[%s2 + $0x90] sm:$0xf]
      %v2013 = vld [vmem:[%s2 + $0x94] sm:$0xf]
      %v2014 = vld [vmem:[%s2 + $0x98] sm:$0xf]
      %v2015 = vld [vmem:[%s2 + $0x9c] sm:$0xf]
      %v2016 = vld [vmem:[%s2 + $0xa0] sm:$0xf]
      %v2017 = vld [vmem:[%s2 + $0xa4] sm:$0xf]
      %v2018 = vld [vmem:[%s2 + $0xa8] sm:$0xf]
      %v2019 = vld [vmem:[%s2 + $0xac] sm:$0xf]
      %v2020 = vld [vmem:[%s2 + $0xb0] sm:$0xf]
      %v2021 = vld [vmem:[%s2 + $0xb4] sm:$0xf]
      %v2022 = vld [vmem:[%s2 + $0xb8] sm:$0xf]
      %v2023 = vld [vmem:[%s2 + $0xbc] sm:$0xf]
      %v2024 = vld [vmem:[%s2 + $0xc0] sm:$0xf]
      %v2025 = vld [vmem:[%s2 + $0xc4] sm:$0xf]
      %v2026 = vld [vmem:[%s2 + $0xc8] sm:$0xf]
      %v2027 = vld [vmem:[%s2 + $0xcc] sm:$0xf]
      %v2028 = vld [vmem:[%s2 + $0xd0] sm:$0xf]
      %v2029 = vld [vmem:[%s2 + $0xd4] sm:$0xf]
      %v2030 = vld [vmem:[%s2 + $0xd8] sm:$0xf]
      %v2031 = vld [vmem:[%s2 + $0xdc] sm:$0xf]
      %v2032 = vld [vmem:[%s2 + $0xe0] sm:$0xf]
      %v2033 = vld [vmem:[%s2 + $0xe4] sm:$0xf]
      %v2034 = vld [vmem:[%s2 + $0xe8] sm:$0xf]
      %v2035 = vld [vmem:[%s2 + $0xec] sm:$0xf]
      %v2036 = vld [vmem:[%s2 + $0xf0] sm:$0xf]
      %v2037 = vld [vmem:[%s2 + $0xf4] sm:$0xf]
      %v2038 = vld [vmem:[%s2 + $0xf8] sm:$0xf]
      %v2039 = vld [vmem:[%s2 + $0xfc] sm:$0xf]
      %v2040 = vld [vmem:[%s3] sm:$0x1]
      %v2042 = vlaneseq
      %v2043 = vshrl.u32 %v2042, 7
      %v2044 = vsub.s32 0, %v2043
      %v2045 = vrot.slane %v2040, %v2044
      %v2111 = vunpack.c.l.b16 %v1976
      %v2112 = vunpack.c.l.b16 %v1977
      %v2113 = vunpack.c.l.b16 %v1978
      %v2114 = vunpack.c.l.b16 %v1979
      %v2115 = vunpack.c.l.b16 %v1980
      %v2116 = vunpack.c.l.b16 %v1981
      %v2117 = vunpack.c.l.b16 %v1982
      %v2118 = vunpack.c.l.b16 %v1983
      %v2119 = vunpack.c.l.b16 %v1984
      %v2120 = vunpack.c.l.b16 %v1985
      %v2121 = vunpack.c.l.b16 %v1986
      %v2122 = vunpack.c.l.b16 %v1987
      %v2123 = vunpack.c.l.b16 %v1988
      %v2124 = vunpack.c.l.b16 %v1989
      %v2125 = vunpack.c.l.b16 %v1990
      %v2126 = vunpack.c.l.b16 %v1991
      %v2127 = vunpack.c.l.b16 %v1992
      %v2128 = vunpack.c.l.b16 %v1993
      %v2129 = vunpack.c.l.b16 %v1994
      %v2130 = vunpack.c.l.b16 %v1995
      %v2131 = vunpack.c.l.b16 %v1996
      %v2132 = vunpack.c.l.b16 %v1997
      %v2133 = vunpack.c.l.b16 %v1998
      %v2134 = vunpack.c.l.b16 %v1999
      %v2135 = vunpack.c.l.b16 %v2000
      %v2136 = vunpack.c.l.b16 %v2001
      %v2137 = vunpack.c.l.b16 %v2002
      %v2138 = vunpack.c.l.b16 %v2003
      %v2139 = vunpack.c.l.b16 %v2004
      %v2140 = vunpack.c.l.b16 %v2005
      %v2141 = vunpack.c.l.b16 %v2006
      %v2142 = vunpack.c.l.b16 %v2007
      %v2143 = vunpack.c.l.b16 %v2008
      %v2144 = vunpack.c.l.b16 %v2009
      %v2145 = vunpack.c.l.b16 %v2010
      %v2146 = vunpack.c.l.b16 %v2011
      %v2147 = vunpack.c.l.b16 %v2012
      %v2148 = vunpack.c.l.b16 %v2013
      %v2149 = vunpack.c.l.b16 %v2014
      %v2150 = vunpack.c.l.b16 %v2015
      %v2151 = vunpack.c.l.b16 %v2016
      %v2152 = vunpack.c.l.b16 %v2017
      %v2153 = vunpack.c.l.b16 %v2018
      %v2154 = vunpack.c.l.b16 %v2019
      %v2155 = vunpack.c.l.b16 %v2020
      %v2156 = vunpack.c.l.b16 %v2021
      %v2157 = vunpack.c.l.b16 %v2022
      %v2158 = vunpack.c.l.b16 %v2023
      %v2159 = vunpack.c.l.b16 %v2024
      %v2160 = vunpack.c.l.b16 %v2025
      %v2161 = vunpack.c.l.b16 %v2026
      %v2162 = vunpack.c.l.b16 %v2027
      %v2163 = vunpack.c.l.b16 %v2028
      %v2164 = vunpack.c.l.b16 %v2029
      %v2165 = vunpack.c.l.b16 %v2030
      %v2166 = vunpack.c.l.b16 %v2031
      %v2167 = vunpack.c.l.b16 %v2032
      %v2168 = vunpack.c.l.b16 %v2033
      %v2169 = vunpack.c.l.b16 %v2034
      %v2170 = vunpack.c.l.b16 %v2035
      %v2171 = vunpack.c.l.b16 %v2036
      %v2172 = vunpack.c.l.b16 %v2037
      %v2173 = vunpack.c.l.b16 %v2038
      %v2174 = vunpack.c.l.b16 %v2039
      %v2175 = vpack.c.b16 %v2112, %v2111
      %v2176 = vpack.c.b16 %v2114, %v2113
      %v2177 = vpack.c.b16 %v2116, %v2115
      %v2178 = vpack.c.b16 %v2118, %v2117
      %v2179 = vpack.c.b16 %v2120, %v2119
      %v2180 = vpack.c.b16 %v2122, %v2121
      %v2181 = vpack.c.b16 %v2124, %v2123
      %v2182 = vpack.c.b16 %v2126, %v2125
      %v2183 = vpack.c.b16 %v2128, %v2127
      %v2184 = vpack.c.b16 %v2130, %v2129
      %v2185 = vpack.c.b16 %v2132, %v2131
      %v2186 = vpack.c.b16 %v2134, %v2133
      %v2187 = vpack.c.b16 %v2136, %v2135
      %v2188 = vpack.c.b16 %v2138, %v2137
      %v2189 = vpack.c.b16 %v2140, %v2139
      %v2190 = vpack.c.b16 %v2142, %v2141
      %v2191 = vpack.c.b16 %v2144, %v2143
      %v2192 = vpack.c.b16 %v2146, %v2145
      %v2193 = vpack.c.b16 %v2148, %v2147
      %v2194 = vpack.c.b16 %v2150, %v2149
      %v2195 = vpack.c.b16 %v2152, %v2151
      %v2196 = vpack.c.b16 %v2154, %v2153
      %v2197 = vpack.c.b16 %v2156, %v2155
      %v2198 = vpack.c.b16 %v2158, %v2157
      %v2199 = vpack.c.b16 %v2160, %v2159
      %v2200 = vpack.c.b16 %v2162, %v2161
      %v2201 = vpack.c.b16 %v2164, %v2163
      %v2202 = vpack.c.b16 %v2166, %v2165
      %v2203 = vpack.c.b16 %v2168, %v2167
      %v2204 = vpack.c.b16 %v2170, %v2169
      %v2205 = vpack.c.b16 %v2172, %v2171
      %v2206 = vpack.c.b16 %v2174, %v2173
      %2239 = vmatprep.subr.bf16.mxu0 0
      %2240 = vmatpush1.bf16.msra.mxu0 %v2175
      %2241 = vmatprep.subr.bf16.mxu0 0
      %2242 = vmatpush1.bf16.msra.mxu0 %v2176
      %2243 = vmatprep.subr.bf16.mxu0 0
      %2244 = vmatpush1.bf16.msra.mxu0 %v2177
      %2245 = vmatprep.subr.bf16.mxu0 0
      %2246 = vmatpush1.bf16.msra.mxu0 %v2178
      %2247 = vmatprep.subr.bf16.mxu0 0
      %2248 = vmatpush1.bf16.msra.mxu0 %v2179
      %2249 = vmatprep.subr.bf16.mxu0 0
      %2250 = vmatpush1.bf16.msra.mxu0 %v2180
      %2251 = vmatprep.subr.bf16.mxu0 0
      %2252 = vmatpush1.bf16.msra.mxu0 %v2181
      %2253 = vmatprep.subr.bf16.mxu0 0
      %2254 = vmatpush1.bf16.msra.mxu0 %v2182
      %2255 = vmatprep.subr.bf16.mxu0 0
      %2256 = vmatpush1.bf16.msra.mxu0 %v2183
      %2257 = vmatprep.subr.bf16.mxu0 0
      %2258 = vmatpush1.bf16.msra.mxu0 %v2184
      %2259 = vmatprep.subr.bf16.mxu0 0
      %2260 = vmatpush1.bf16.msra.mxu0 %v2185
      %2261 = vmatprep.subr.bf16.mxu0 0
      %2262 = vmatpush1.bf16.msra.mxu0 %v2186
      %2263 = vmatprep.subr.bf16.mxu0 0
      %2264 = vmatpush1.bf16.msra.mxu0 %v2187
      %2265 = vmatprep.subr.bf16.mxu0 0
      %2266 = vmatpush1.bf16.msra.mxu0 %v2188
      %2267 = vmatprep.subr.bf16.mxu0 0
      %2268 = vmatpush1.bf16.msra.mxu0 %v2189
      %2269 = vmatprep.subr.bf16.mxu0 0
      %2270 = vmatpush1.bf16.msra.mxu0 %v2190
      %2271 = vmatprep.mubr.bf16.mxu0 %v1961
      %2272 = vmatmul.mubr.bf16.gmra.mrb[0].mxu0 %v1960
      %v2273 = vpop.f32.mrb[0].mxu0
      %v2274 = vadd.f32 %v2045, %v2273
      %v2275 = vpop.f32.mrb[0].mxu0
      %v2276 = vpop.f32.mrb[0].mxu0
      %v2277 = vadd.f32 %v2045, %v2276
      %v2278 = vpop.f32.mrb[0].mxu0
      %2279 = vmatprep.mubr.bf16.mxu0 %v1965
      %2280 = vmatmul.mubr.bf16.gmra.mrb[0].mxu0 %v1964
      %v2281 = vpop.f32.mrb[0].mxu0
      %v2282 = vadd.f32 %v2045, %v2281
      %v2283 = vpop.f32.mrb[0].mxu0
      %v2284 = vpop.f32.mrb[0].mxu0
      %v2285 = vadd.f32 %v2045, %v2284
      %v2286 = vpop.f32.mrb[0].mxu0
      %2287 = vmatprep.mubr.bf16.mxu0 %v1969
      %2288 = vmatmul.mubr.bf16.gmra.mrb[0].mxu0 %v1968
      %v2289 = vpop.f32.mrb[0].mxu0
      %v2290 = vadd.f32 %v2045, %v2289
      %v2291 = vpop.f32.mrb[0].mxu0
      %v2292 = vpop.f32.mrb[0].mxu0
      %v2293 = vadd.f32 %v2045, %v2292
      %v2294 = vpop.f32.mrb[0].mxu0
      %2295 = vmatprep.mubr.bf16.mxu0 %v1973
      %2296 = vmatmul.mubr.bf16.gmra.mrb[0].mxu0 %v1972
      %v2297 = vpop.f32.mrb[0].mxu0
      %v2298 = vadd.f32 %v2045, %v2297
      %v2299 = vpop.f32.mrb[0].mxu0
      %v2300 = vpop.f32.mrb[0].mxu0
      %v2301 = vadd.f32 %v2045, %v2300
      %v2302 = vpop.f32.mrb[0].mxu0
      %2303 = vdwg.mxu0
      %2304 = vmatprep.subr.bf16.mxu0 0
      %2305 = vmatpush1.bf16.msra.mxu0 %v2191
      %2306 = vmatprep.subr.bf16.mxu0 0
      %2307 = vmatpush1.bf16.msra.mxu0 %v2192
      %2308 = vmatprep.subr.bf16.mxu0 0
      %2309 = vmatpush1.bf16.msra.mxu0 %v2193
      %2310 = vmatprep.subr.bf16.mxu0 0
      %2311 = vmatpush1.bf16.msra.mxu0 %v2194
      %2312 = vmatprep.subr.bf16.mxu0 0
      %2313 = vmatpush1.bf16.msra.mxu0 %v2195
      %2314 = vmatprep.subr.bf16.mxu0 0
      %2315 = vmatpush1.bf16.msra.mxu0 %v2196
      %2316 = vmatprep.subr.bf16.mxu0 0
      %2317 = vmatpush1.bf16.msra.mxu0 %v2197
      %2318 = vmatprep.subr.bf16.mxu0 0
      %2319 = vmatpush1.bf16.msra.mxu0 %v2198
      %2320 = vmatprep.subr.bf16.mxu0 0
      %2321 = vmatpush1.bf16.msra.mxu0 %v2199
      %2322 = vmatprep.subr.bf16.mxu0 0
      %2323 = vmatpush1.bf16.msra.mxu0 %v2200
      %2324 = vmatprep.subr.bf16.mxu0 0
      %2325 = vmatpush1.bf16.msra.mxu0 %v2201
      %2326 = vmatprep.subr.bf16.mxu0 0
      %2327 = vmatpush1.bf16.msra.mxu0 %v2202
      %2328 = vmatprep.subr.bf16.mxu0 0
      %2329 = vmatpush1.bf16.msra.mxu0 %v2203
      %2330 = vmatprep.subr.bf16.mxu0 0
      %2331 = vmatpush1.bf16.msra.mxu0 %v2204
      %2332 = vmatprep.subr.bf16.mxu0 0
      %2333 = vmatpush1.bf16.msra.mxu0 %v2205
      %2334 = vmatprep.subr.bf16.mxu0 0
      %2335 = vmatpush1.bf16.msra.mxu0 %v2206
      %2336 = vmatprep.mubr.bf16.mxu0 %v1963
      %2337 = vmatmul.mubr.bf16.gmra.mrb[0].mxu0 %v1962
      %v2338 = vpop.f32.mrb[0].mxu0
      %v2339 = vadd.f32 %v2274, %v2338
      %v2340 = vpop.f32.mrb[0].mxu0
      %v2341 = vpop.f32.mrb[0].mxu0
      %v2342 = vadd.f32 %v2277, %v2341
      %v2343 = vpop.f32.mrb[0].mxu0
      %2344 = vmatprep.mubr.bf16.mxu0 %v1967
      %2345 = vmatmul.mubr.bf16.gmra.mrb[0].mxu0 %v1966
      %v2346 = vpop.f32.mrb[0].mxu0
      %v2347 = vadd.f32 %v2282, %v2346
      %v2348 = vpop.f32.mrb[0].mxu0
      %v2349 = vpop.f32.mrb[0].mxu0
      %v2350 = vadd.f32 %v2285, %v2349
      %v2351 = vpop.f32.mrb[0].mxu0
      %2352 = vmatprep.mubr.bf16.mxu0 %v1971
      %2353 = vmatmul.mubr.bf16.gmra.mrb[0].mxu0 %v1970
      %v2354 = vpop.f32.mrb[0].mxu0
      %v2355 = vadd.f32 %v2290, %v2354
      %v2356 = vpop.f32.mrb[0].mxu0
      %v2357 = vpop.f32.mrb[0].mxu0
      %v2358 = vadd.f32 %v2293, %v2357
      %v2359 = vpop.f32.mrb[0].mxu0
      %2360 = vmatprep.mubr.bf16.mxu0 %v1975
      %2361 = vmatmul.mubr.bf16.gmra.mrb[0].mxu0 %v1974
      %v2362 = vpop.f32.mrb[0].mxu0
      %v2363 = vadd.f32 %v2298, %v2362
      %v2364 = vpop.f32.mrb[0].mxu0
      %v2365 = vpop.f32.mrb[0].mxu0
      %v2366 = vadd.f32 %v2301, %v2365
      %v2367 = vpop.f32.mrb[0].mxu0
      %2368 = vdwg.mxu0
      %2369 = vst [vmem:[%s233] sm:$0xff] %v2339
      %2370 = vst [vmem:[%s233 + $0x8] sm:$0xff] %v2342
      %2371 = vst [vmem:[%s233 + $0x10] sm:$0xff] %v2347
      %2372 = vst [vmem:[%s233 + $0x18] sm:$0xff] %v2350
      %2373 = vst [vmem:[%s233 + $0x20] sm:$0xff] %v2355
      %2374 = vst [vmem:[%s233 + $0x28] sm:$0xff] %v2358
      %2375 = vst [vmem:[%s233 + $0x30] sm:$0xff] %v2363
      %2376 = vst [vmem:[%s233 + $0x38] sm:$0xff] %v2366
      %p2377 = scmp.lt.s32.totalorder %s19, 1
      %s2378 = scalar_select %p2377, %s19, 1
      %p2379 = scmp.lt.s32.totalorder %s20, 0
      %s2380 = scalar_select %p2379, %s20, 0
      %s2381 = smul.addr %s2380, 8
      %s2382 = smul.addr %s2378, 8
      %s2383 = sadd.s32 %s2381, %s2382
      %s2384 = smul.addr %s2383, 8
      %s2385 = scalar_lea.vmem %s4, %s2384
      // Predicated region
      $region37: #{new_model_forward.3} parent=35 // pred_check
        %p2386 = pneg %p138
      $region38: #{new_model_forward.3} parent=35 // pred_check_branch
        %2388 = sbr.rel (%p2386) target = $region40
      $region39: #{new_model_forward.3} parent=35 // pred_region
        _
      $region40: #{new_model_forward.3} parent=35 // pred_fallthru
        _
    $region36: #{new_model_forward.3} parent=5 // pred_fallthru
      _
    %p2389 = scmp.le.s32.totalorder 2, %s10
    // Predicated region
    $region41: #{new_model_forward.3} parent=5 // pred_check
      %p2390 = pneg %p2389
    $region42: #{new_model_forward.3} parent=5 // pred_check_branch
      %2392 = sbr.rel (%p2390) target = $region44
    $region43: #{new_model_forward.3} parent=5 // pred_region
      %s2393 = ssub.s32 %s10, 2
      // Predicated region
      $region45: #{new_model_forward.3} parent=43 // pred_check
        %p2394 = pneg %p144
      $region46: #{new_model_forward.3} parent=43 // pred_check_branch
        %2396 = sbr.rel (%p2394) target = $region48
      $region47: #{new_model_forward.3} parent=43 // pred_region
        %p2397 = scmp.lt.s32.totalorder %s21, 1
        %s2398 = scalar_select %p2397, %s21, 1
        %p2399 = scmp.lt.s32.totalorder %s22, 0
        %s2400 = scalar_select %p2399, %s22, 0
        %s2401 = smul.addr %s2400, 8
        %s2402 = smul.addr %s2398, 8
        %s2403 = sadd.s32 %s2401, %s2402
        %s2404 = smul.addr %s2403, 8
        %s2405 = scalar_lea.vmem %s4, %s2404
      $region48: #{new_model_forward.3} parent=43 // pred_fallthru
        _
    $region44: #{new_model_forward.3} parent=5 // pred_fallthru
      _
  $region6: #{new_model_forward.3} parent=0 // loop_footer
    %s14 = sadd.s32 1, %s10
  $region7: #{new_model_forward.3} parent=0 // loop_footer_branch
    %9 = sbr.rel target = $region3
  $region8: #{new_model_forward.3} parent=0 // loop_exit
    _

</llo_original>
